<compile_context>
chip_gen: v5e
topology: v5e:2x2
jax: 0.10.0
libtpu: 0.0.40
codegen_flags: <defaults>
</compile_context>

<pallas_src>
import jax
import jax.numpy as jnp
import numpy as np
from jax import lax
from jax.experimental import pallas as pl
from jax.experimental.pallas import tpu as pltpu


OUT_DIM = 4   # Self_Attn.out_dim (fixed in the PyTorch module)
DP = 8        # OUT_DIM zero-padded to one full 8-sublane group


# ------------------------------ Pallas kernel ------------------------------ #

def _self_attn_kernel(x_ref, w_proj_ref, b_proj_ref, w_at_ref, b_at_ref,
                      sigma_ref, o_ref):
    """Fused Self_Attn forward for a block of `bb` batch elements.

    x:      (bb, C, HW)
    w_proj: (3*DP, C)   rows [0:DP]=theta, [DP:2DP]=phi, [2DP:3DP]=g
                        (rows D..DP-1 of each group are zero -> exact padding)
    proj   = W_proj @ x + b_proj                     (3*DP, HW)
    attn^T = softmax_j(phi^T . theta)                (HW_j, HW_i)
    attn_g = g @ attn^T                              (DP, HW)
    out    = x + sigma * (W_at @ attn_g + b_at)      (C, HW)
    """
    sigma = sigma_ref[0]                  # scalar from SMEM
    bb = x_ref.shape[0]

    for b in range(bb):                   # static unroll (bb is 1 or B, tiny)
        x = x_ref[b]                                                  # (C, HW)

        # Fused theta/phi/g 1x1 convs: one MXU matmul.
        proj = jnp.dot(w_proj_ref[...], x,
                       preferred_element_type=jnp.float32) + b_proj_ref[...]
        theta = proj[0 * DP:1 * DP]                                   # (DP, HW)
        phi = proj[1 * DP:2 * DP]                                     # (DP, HW)
        g = proj[2 * DP:3 * DP]                                       # (DP, HW)

        # Transposed attention logits: scores_t[j, i] = phi[:, j] . theta[:, i]
        # (LHS-transposed contraction; pad rows are zero so they add nothing).
        scores_t = lax.dot_general(
            phi, theta, (((0,), (0,)), ((), ())),
            preferred_element_type=jnp.float32)                       # (HW, HW)

        # softmax over j (axis 0)  ==  torch softmax(dim=-1) on attn[i, j]
        m = jnp.max(scores_t, axis=0, keepdims=True)
        e = jnp.exp(scores_t - m)
        inv = pl.reciprocal(jnp.sum(e, axis=0, keepdims=True), approx=False)
        attn_t = e * inv                                              # (HW, HW)

        # attn_g[d, i] = sum_j g[d, j] * attn[i, j]
        attn_g = jnp.dot(g, attn_t, preferred_element_type=jnp.float32)

        # Final 1x1 conv back to C channels + sigma-scaled residual.
        o = jnp.dot(w_at_ref[...], attn_g,
                    preferred_element_type=jnp.float32) + b_at_ref[...]
        o_ref[b] = (x.astype(jnp.float32) + sigma * o).astype(o_ref.dtype)


# ------------------------------ JAX wrapper -------------------------------- #

def _num_tensorcores_per_chip():
    """v7x exposes 2 TensorCores per chip; v4/v5e/v5p/v6e expose 1."""
    try:
        kind = jax.devices()[0].device_kind.lower()
    except Exception:
        return 1
    return 2 if "7" in kind else 1


def _batch_block(batch):
    # v7x: one batch element per grid step -> both TensorCores get work.
    # Single-TC chips (v5e/v6e): fold the whole batch into one grid step to
    # avoid per-step pipeline/DMA-prologue overhead.
    if _num_tensorcores_per_chip() >= 2 and batch > 1:
        return 1
    return batch


def pack_params(params, out_dim=OUT_DIM, dp=DP):
    """One-time repack of module weights into the kernel's fused/padded layout."""
    C = params["w_attn"].shape[0]
    D = out_dim

    def pad_group(w, b):
        wp = jnp.zeros((dp, C), jnp.float32).at[:D, :].set(w)
        bp = jnp.zeros((dp,), jnp.float32).at[:D].set(b)
        return wp, bp

    wt, bt = pad_group(params["w_theta"], params["b_theta"])
    wp_, bp_ = pad_group(params["w_phi"], params["b_phi"])
    wg, bg = pad_group(params["w_g"], params["b_g"])

    return dict(
        w_proj=jnp.concatenate([wt, wp_, wg], axis=0),                 # (3*DP, C)
        b_proj=jnp.concatenate([bt, bp_, bg], axis=0).reshape(3 * dp, 1),
        w_attn=jnp.zeros((C, dp), jnp.float32).at[:, :D].set(params["w_attn"]),
        b_attn=params["b_attn"].reshape(C, 1).astype(jnp.float32),
        sigma=params["sigma"].astype(jnp.float32),                     # (1,)
    )


def self_attn_forward(x, packed):
    """x: (B, C, H, W) NCHW, like the PyTorch module.  Returns (B, C, H, W)."""
    B, C, H, W = x.shape
    HW = H * W

    x_chw = x.reshape(B, C, HW)          # no transpose: single (C, HW) copy of x
    bb = _batch_block(B)
    grid = (B // bb,)

    out = pl.pallas_call(
        _self_attn_kernel,
        out_shape=jax.ShapeDtypeStruct((B, C, HW), x.dtype),
        grid=grid,
        in_specs=[
            pl.BlockSpec((bb, C, HW), lambda b: (b, 0, 0)),    # x
            pl.BlockSpec((3 * DP, C), lambda b: (0, 0)),       # fused W_theta/phi/g
            pl.BlockSpec((3 * DP, 1), lambda b: (0, 0)),       # fused biases
            pl.BlockSpec((C, DP), lambda b: (0, 0)),           # W_attn (padded cols)
            pl.BlockSpec((C, 1), lambda b: (0, 0)),            # b_attn
            pl.BlockSpec(memory_space=pltpu.MemorySpace.SMEM), # sigma scalar
        ],
        out_specs=pl.BlockSpec((bb, C, HW), lambda b: (b, 0, 0)),
        compiler_params=pltpu.CompilerParams(
            dimension_semantics=("parallel",)),
    )(x_chw, packed["w_proj"], packed["b_proj"],
      packed["w_attn"], packed["b_attn"], packed["sigma"])

    return out.reshape(B, C, H, W)


# -------------------------- deterministic params --------------------------- #

def _spectral_normalize(w):
    """torch spectral_norm: divide weight (out, in) by its top singular value."""
    s = float(np.linalg.svd(np.asarray(w), compute_uv=False)[0])
    return w / s


def init_params(key, in_channels, out_dim=OUT_DIM):
    C, D = in_channels, out_dim
    ks = jax.random.split(key, 9)
    params = dict(
        # snconv1x1_theta: plain Conv2d (no spectral norm in the module)
        w_theta=jax.random.normal(ks[0], (D, C), jnp.float32) / np.sqrt(C),
        b_theta=jax.random.normal(ks[1], (D,), jnp.float32) * 0.1,
        # snconv1x1_phi / g / attn: spectral-normalized conv weights
        w_phi=_spectral_normalize(
            jax.random.normal(ks[2], (D, C), jnp.float32) / np.sqrt(C)),
        b_phi=jax.random.normal(ks[3], (D,), jnp.float32) * 0.1,
        w_g=_spectral_normalize(
            jax.random.normal(ks[4], (D, C), jnp.float32) / np.sqrt(C)),
        b_g=jax.random.normal(ks[5], (D,), jnp.float32) * 0.1,
        w_attn=_spectral_normalize(
            jax.random.normal(ks[6], (C, D), jnp.float32) / np.sqrt(D)),
        b_attn=jax.random.normal(ks[7], (C,), jnp.float32) * 0.1,
        # PyTorch initializes sigma to 0 (forward would reduce to out == x);
        # use a nonzero deterministic value so the attention path is exercised.
        sigma=jnp.full((1,), 0.75, jnp.float32),
    )
    return params


# --------------------------- pure-JAX reference ----------------------------- #

def ref_forward(x, p):
    """Direct transcription of the PyTorch Self_Attn.forward (NCHW)."""
    B, C, H, W = x.shape
    N = H * W
    xf = x.reshape(B, C, N)
    theta = jnp.einsum("dc,bcn->bdn", p["w_theta"], xf) + p["b_theta"][None, :, None]
    phi = jnp.einsum("dc,bcn->bdn", p["w_phi"], xf) + p["b_phi"][None, :, None]
    g = jnp.einsum("dc,bcn->bdn", p["w_g"], xf) + p["b_g"][None, :, None]
    attn = jax.nn.softmax(jnp.einsum("bdn,bdm->bnm", theta, phi), axis=-1)
    attn_g = jnp.einsum("bdm,bnm->bdn", g, attn)      # bmm(g, attn^T)
    o = jnp.einsum("cd,bdn->bcn", p["w_attn"], attn_g) + p["b_attn"][None, :, None]
    return x + p["sigma"][0] * o.reshape(B, C, H, W)


# ---------------------------------- main ------------------------------------ #

if __name__ == "__main__":
    key = jax.random.PRNGKey(0)
    pkey, xkey = jax.random.split(key)

    # PyTorch module input is NCHW: (B, C, H, W)
    B, C, H, W = 2, 32, 16, 16
    params = init_params(pkey, C)
    packed = pack_params(params)
    x = jax.random.normal(xkey, (B, C, H, W), jnp.float32)

    out = jax.block_until_ready(self_attn_forward(x, packed))
    ref = jax.block_until_ready(ref_forward(x, params))

    assert out.shape == (B, C, H, W)
    np.testing.assert_allclose(np.asarray(out), np.asarray(ref),
                               rtol=5e-4, atol=5e-4)
    print("KERNEL_OK")
</pallas_src>

<mosaic_0001>
module attributes {stable_mosaic.version = 11 : i64} {
  func.func @_self_attn_kernel(%arg0: i32, %arg1: memref<2x32x256xf32, #tpu.memory_space<vmem>>, %arg2: memref<24x32xf32, #tpu.memory_space<vmem>>, %arg3: memref<24x1xf32, #tpu.memory_space<vmem>>, %arg4: memref<32x8xf32, #tpu.memory_space<vmem>>, %arg5: memref<32x1xf32, #tpu.memory_space<vmem>>, %arg6: memref<1xf32, #tpu.memory_space<smem>>, %arg7: memref<2x32x256xf32, #tpu.memory_space<vmem>>) attributes {dimension_semantics = [#tpu.dimension_semantics<parallel>], iteration_bounds = array<i64: 1>, scalar_prefetch = 0 : i64, scratch_operands = 0 : i64, tpu.core_type = #tpu.core_type<tc>, window_params = [{transform_indices = @transform_0, window_bounds = array<i64: 2, 32, 256>}, {pipeline_mode = #tpu.pipeline_mode<synchronous>, transform_indices = @transform_1, window_bounds = array<i64: 24, 32>}, {pipeline_mode = #tpu.pipeline_mode<synchronous>, transform_indices = @transform_2, window_bounds = array<i64: 24, 1>}, {pipeline_mode = #tpu.pipeline_mode<synchronous>, transform_indices = @transform_3, window_bounds = array<i64: 32, 8>}, {pipeline_mode = #tpu.pipeline_mode<synchronous>, transform_indices = @transform_4, window_bounds = array<i64: 32, 1>}, {transform_indices = @transform_5, window_bounds = array<i64: 1>}, {transform_indices = @transform_6, window_bounds = array<i64: 2, 32, 256>}]} {
    %c0 = arith.constant 0 : index
    %0 = memref.load %arg6[%c0] : memref<1xf32, #tpu.memory_space<smem>>
    %c0_0 = arith.constant 0 : index
    %c0_1 = arith.constant 0 : index
    %c0_2 = arith.constant 0 : index
    %1 = vector.load %arg1[%c0_0, %c0_1, %c0_2] : memref<2x32x256xf32, #tpu.memory_space<vmem>>, vector<1x32x256xf32>
    %2 = vector.shape_cast %1 : vector<1x32x256xf32> to vector<32x256xf32>
    %c0_3 = arith.constant 0 : index
    %c0_4 = arith.constant 0 : index
    %3 = vector.load %arg2[%c0_3, %c0_4] : memref<24x32xf32, #tpu.memory_space<vmem>>, vector<24x32xf32>
    %cst = arith.constant dense<0.000000e+00> : vector<24x256xf32>
    %4 = tpu.matmul %3, %2, %cst {dimension_numbers = #tpu.dot_dimension_numbers<[1], [0], [0], [1], [0, 0, 1, 1], [], []>} : vector<24x32xf32>, vector<32x256xf32>, vector<24x256xf32> -> vector<24x256xf32>
    %c0_5 = arith.constant 0 : index
    %c0_6 = arith.constant 0 : index
    %5 = vector.load %arg3[%c0_5, %c0_6] : memref<24x1xf32, #tpu.memory_space<vmem>>, vector<24x1xf32>
    %6 = vector.broadcast %5 : vector<24x1xf32> to vector<24x256xf32>
    %7 = arith.addf %4, %6 : vector<24x256xf32>
    %8 = vector.extract_strided_slice %7 {offsets = [0, 0], sizes = [8, 256], strides = [1, 1]} : vector<24x256xf32> to vector<8x256xf32>
    %9 = vector.extract_strided_slice %7 {offsets = [8, 0], sizes = [8, 256], strides = [1, 1]} : vector<24x256xf32> to vector<8x256xf32>
    %10 = vector.extract_strided_slice %7 {offsets = [16, 0], sizes = [8, 256], strides = [1, 1]} : vector<24x256xf32> to vector<8x256xf32>
    %cst_7 = arith.constant dense<0.000000e+00> : vector<256x256xf32>
    %11 = tpu.matmul %9, %8, %cst_7 {dimension_numbers = #tpu.dot_dimension_numbers<[0], [0], [1], [1], [0, 1, 1, 1], [], []>} : vector<8x256xf32>, vector<8x256xf32>, vector<256x256xf32> -> vector<256x256xf32>
    %cst_8 = arith.constant dense<0xFF800000> : vector<256xf32>
    %12 = vector.multi_reduction <maximumf>, %11, %cst_8 [0] : vector<256x256xf32> to vector<256xf32>
    %13 = vector.shape_cast %12 : vector<256xf32> to vector<1x256xf32>
    %14 = vector.broadcast %13 : vector<1x256xf32> to vector<256x256xf32>
    %15 = arith.subf %11, %14 : vector<256x256xf32>
    %16 = math.exp %15 : vector<256x256xf32>
    %cst_9 = arith.constant dense<0.000000e+00> : vector<256xf32>
    %17 = vector.multi_reduction <add>, %16, %cst_9 [0] : vector<256x256xf32> to vector<256xf32>
    %18 = vector.shape_cast %17 : vector<256xf32> to vector<1x256xf32>
    %19 = tpu.reciprocal %18 : vector<1x256xf32> -> vector<1x256xf32>
    %20 = vector.broadcast %19 : vector<1x256xf32> to vector<256x256xf32>
    %21 = arith.mulf %16, %20 : vector<256x256xf32>
    %cst_10 = arith.constant dense<0.000000e+00> : vector<8x256xf32>
    %22 = tpu.matmul %10, %21, %cst_10 {dimension_numbers = #tpu.dot_dimension_numbers<[1], [0], [0], [1], [0, 0, 1, 1], [], []>} : vector<8x256xf32>, vector<256x256xf32>, vector<8x256xf32> -> vector<8x256xf32>
    %c0_11 = arith.constant 0 : index
    %c0_12 = arith.constant 0 : index
    %23 = vector.load %arg4[%c0_11, %c0_12] : memref<32x8xf32, #tpu.memory_space<vmem>>, vector<32x8xf32>
    %cst_13 = arith.constant dense<0.000000e+00> : vector<32x256xf32>
    %24 = tpu.matmul %23, %22, %cst_13 {dimension_numbers = #tpu.dot_dimension_numbers<[1], [0], [0], [1], [0, 0, 1, 1], [], []>} : vector<32x8xf32>, vector<8x256xf32>, vector<32x256xf32> -> vector<32x256xf32>
    %c0_14 = arith.constant 0 : index
    %c0_15 = arith.constant 0 : index
    %25 = vector.load %arg5[%c0_14, %c0_15] : memref<32x1xf32, #tpu.memory_space<vmem>>, vector<32x1xf32>
    %26 = vector.broadcast %25 : vector<32x1xf32> to vector<32x256xf32>
    %27 = arith.addf %24, %26 : vector<32x256xf32>
    %28 = vector.broadcast %0 : f32 to vector<32x256xf32>
    %29 = arith.mulf %28, %27 : vector<32x256xf32>
    %30 = arith.addf %2, %29 : vector<32x256xf32>
    %c0_16 = arith.constant 0 : index
    %c0_17 = arith.constant 0 : index
    %c0_18 = arith.constant 0 : index
    %31 = vector.load %arg7[%c0_16, %c0_17, %c0_18] : memref<2x32x256xf32, #tpu.memory_space<vmem>>, vector<1x32x256xf32>
    %32 = vector.shape_cast %31 : vector<1x32x256xf32> to vector<32x256xf32>
    %33 = vector.shape_cast %30 : vector<32x256xf32> to vector<1x32x256xf32>
    tpu.vector_store %arg7[%c0_16, %c0_17, %c0_18], %33 {strides = array<i32>} : memref<2x32x256xf32, #tpu.memory_space<vmem>>, vector<1x32x256xf32>,
    %c1 = arith.constant 1 : index
    %c0_19 = arith.constant 0 : index
    %c0_20 = arith.constant 0 : index
    %34 = vector.load %arg1[%c1, %c0_19, %c0_20] : memref<2x32x256xf32, #tpu.memory_space<vmem>>, vector<1x32x256xf32>
    %35 = vector.shape_cast %34 : vector<1x32x256xf32> to vector<32x256xf32>
    %c0_21 = arith.constant 0 : index
    %c0_22 = arith.constant 0 : index
    %36 = vector.load %arg2[%c0_21, %c0_22] : memref<24x32xf32, #tpu.memory_space<vmem>>, vector<24x32xf32>
    %cst_23 = arith.constant dense<0.000000e+00> : vector<24x256xf32>
    %37 = tpu.matmul %36, %35, %cst_23 {dimension_numbers = #tpu.dot_dimension_numbers<[1], [0], [0], [1], [0, 0, 1, 1], [], []>} : vector<24x32xf32>, vector<32x256xf32>, vector<24x256xf32> -> vector<24x256xf32>
    %c0_24 = arith.constant 0 : index
    %c0_25 = arith.constant 0 : index
    %38 = vector.load %arg3[%c0_24, %c0_25] : memref<24x1xf32, #tpu.memory_space<vmem>>, vector<24x1xf32>
    %39 = vector.broadcast %38 : vector<24x1xf32> to vector<24x256xf32>
    %40 = arith.addf %37, %39 : vector<24x256xf32>
    %41 = vector.extract_strided_slice %40 {offsets = [0, 0], sizes = [8, 256], strides = [1, 1]} : vector<24x256xf32> to vector<8x256xf32>
    %42 = vector.extract_strided_slice %40 {offsets = [8, 0], sizes = [8, 256], strides = [1, 1]} : vector<24x256xf32> to vector<8x256xf32>
    %43 = vector.extract_strided_slice %40 {offsets = [16, 0], sizes = [8, 256], strides = [1, 1]} : vector<24x256xf32> to vector<8x256xf32>
    %cst_26 = arith.constant dense<0.000000e+00> : vector<256x256xf32>
    %44 = tpu.matmul %42, %41, %cst_26 {dimension_numbers = #tpu.dot_dimension_numbers<[0], [0], [1], [1], [0, 1, 1, 1], [], []>} : vector<8x256xf32>, vector<8x256xf32>, vector<256x256xf32> -> vector<256x256xf32>
    %cst_27 = arith.constant dense<0xFF800000> : vector<256xf32>
    %45 = vector.multi_reduction <maximumf>, %44, %cst_27 [0] : vector<256x256xf32> to vector<256xf32>
    %46 = vector.shape_cast %45 : vector<256xf32> to vector<1x256xf32>
    %47 = vector.broadcast %46 : vector<1x256xf32> to vector<256x256xf32>
    %48 = arith.subf %44, %47 : vector<256x256xf32>
    %49 = math.exp %48 : vector<256x256xf32>
    %cst_28 = arith.constant dense<0.000000e+00> : vector<256xf32>
    %50 = vector.multi_reduction <add>, %49, %cst_28 [0] : vector<256x256xf32> to vector<256xf32>
    %51 = vector.shape_cast %50 : vector<256xf32> to vector<1x256xf32>
    %52 = tpu.reciprocal %51 : vector<1x256xf32> -> vector<1x256xf32>
    %53 = vector.broadcast %52 : vector<1x256xf32> to vector<256x256xf32>
    %54 = arith.mulf %49, %53 : vector<256x256xf32>
    %cst_29 = arith.constant dense<0.000000e+00> : vector<8x256xf32>
    %55 = tpu.matmul %43, %54, %cst_29 {dimension_numbers = #tpu.dot_dimension_numbers<[1], [0], [0], [1], [0, 0, 1, 1], [], []>} : vector<8x256xf32>, vector<256x256xf32>, vector<8x256xf32> -> vector<8x256xf32>
    %c0_30 = arith.constant 0 : index
    %c0_31 = arith.constant 0 : index
    %56 = vector.load %arg4[%c0_30, %c0_31] : memref<32x8xf32, #tpu.memory_space<vmem>>, vector<32x8xf32>
    %cst_32 = arith.constant dense<0.000000e+00> : vector<32x256xf32>
    %57 = tpu.matmul %56, %55, %cst_32 {dimension_numbers = #tpu.dot_dimension_numbers<[1], [0], [0], [1], [0, 0, 1, 1], [], []>} : vector<32x8xf32>, vector<8x256xf32>, vector<32x256xf32> -> vector<32x256xf32>
    %c0_33 = arith.constant 0 : index
    %c0_34 = arith.constant 0 : index
    %58 = vector.load %arg5[%c0_33, %c0_34] : memref<32x1xf32, #tpu.memory_space<vmem>>, vector<32x1xf32>
    %59 = vector.broadcast %58 : vector<32x1xf32> to vector<32x256xf32>
    %60 = arith.addf %57, %59 : vector<32x256xf32>
    %61 = vector.broadcast %0 : f32 to vector<32x256xf32>
    %62 = arith.mulf %61, %60 : vector<32x256xf32>
    %63 = arith.addf %35, %62 : vector<32x256xf32>
    %c1_35 = arith.constant 1 : index
    %c0_36 = arith.constant 0 : index
    %c0_37 = arith.constant 0 : index
    %64 = vector.load %arg7[%c1_35, %c0_36, %c0_37] : memref<2x32x256xf32, #tpu.memory_space<vmem>>, vector<1x32x256xf32>
    %65 = vector.shape_cast %64 : vector<1x32x256xf32> to vector<32x256xf32>
    %66 = vector.shape_cast %63 : vector<32x256xf32> to vector<1x32x256xf32>
    tpu.vector_store %arg7[%c1_35, %c0_36, %c0_37], %66 {strides = array<i32>} : memref<2x32x256xf32, #tpu.memory_space<vmem>>, vector<1x32x256xf32>,
    return
  }
  func.func @transform_0(%arg0: i32) -> (i32, i32, i32) {
    %c0_i32 = arith.constant 0 : i32
    %c0_i32_0 = arith.constant 0 : i32
    %c0_i32_1 = arith.constant 0 : i32
    return %arg0, %c0_i32, %c0_i32_0 : i32, i32, i32
  }
  func.func @transform_1(%arg0: i32) -> (i32, i32) {
    %c0_i32 = arith.constant 0 : i32
    %c0_i32_0 = arith.constant 0 : i32
    %c0_i32_1 = arith.constant 0 : i32
    return %c0_i32, %c0_i32_0 : i32, i32
  }
  func.func @transform_2(%arg0: i32) -> (i32, i32) {
    %c0_i32 = arith.constant 0 : i32
    %c0_i32_0 = arith.constant 0 : i32
    %c0_i32_1 = arith.constant 0 : i32
    return %c0_i32, %c0_i32_0 : i32, i32
  }
  func.func @transform_3(%arg0: i32) -> (i32, i32) {
    %c0_i32 = arith.constant 0 : i32
    %c0_i32_0 = arith.constant 0 : i32
    %c0_i32_1 = arith.constant 0 : i32
    return %c0_i32, %c0_i32_0 : i32, i32
  }
  func.func @transform_4(%arg0: i32) -> (i32, i32) {
    %c0_i32 = arith.constant 0 : i32
    %c0_i32_0 = arith.constant 0 : i32
    %c0_i32_1 = arith.constant 0 : i32
    return %c0_i32, %c0_i32_0 : i32, i32
  }
  func.func @transform_5(%arg0: i32) -> i32 {
    %c0_i32 = arith.constant 0 : i32
    %c0_i32_0 = arith.constant 0 : i32
    return %c0_i32 : i32
  }
  func.func @transform_6(%arg0: i32) -> (i32, i32, i32) {
    %c0_i32 = arith.constant 0 : i32
    %c0_i32_0 = arith.constant 0 : i32
    %c0_i32_1 = arith.constant 0 : i32
    return %arg0, %c0_i32, %c0_i32_0 : i32, i32, i32
  }
}

</mosaic_0001>

<llo_original>
// kernel: tpu_custom_call.1
$region0: #{tpu_custom_call.1}
  #allocation0 [shape = 'u32[]', space=smem, size = 0x4, offset = 0x4, fixed_abs, tag = 'smem constant byte address 0x4 - core index']
  #allocation1 [shape = 'u32[72,128]{1,0:T(1,128)}', space=vmem, size = 0x9000, scoped, tag = 'internal scratch']
  #allocation2 [shape = 'f32[1]{0:T(128)S(6)}', space=smem, size = 0x200, scoped, tag = 'scoped memory for tpu_custom_call.1']
  %s0 = inlined_call_operand.hbm [shape: f32[2,32,256], index: 0, kind: input, shape index: {}]
  %s1 = inlined_call_operand.vmem [shape: f32[24,32], index: 1, kind: input, shape index: {}]
  %s2 = inlined_call_operand.vmem [shape: f32[24,1], index: 2, kind: input, shape index: {}]
  %s3 = inlined_call_operand.vmem [shape: f32[32,8], index: 3, kind: input, shape index: {}]
  %s4 = inlined_call_operand.vmem [shape: f32[32,1], index: 4, kind: input, shape index: {}]
  %s5 = inlined_call_operand.<no memory space> [shape: f32[1], index: 5, kind: input, shape index: {}]
  %s6 = inlined_call_operand.hbm [shape: f32[2,32,256], index: 6, kind: output, shape index: {}]
  %s7 = sld [smem:[#allocation0]]
  $region38: #{tpu_custom_call.1} parent=0
    _
  %s9 = ssub.s32 1, %s7
  %s10 = scalar_select 0, %s9, %s7
  %11 = sst [smem:[#allocation2]] %s5
  $region1: #{tpu_custom_call.1} parent=0
    #allocation3 [shape = 'u8[65536]{0}', space=vmem, size = 0x10000, scoped, tag = 'input window, operand 0, single buffered']
    #allocation4 [shape = 's32[1]{0}', space=sflag, size = 0x4, scoped, tag = 'scoped memory for tpu_custom_call.1']
    #allocation5 [shape = 's32[1]{0}', space=sflag, size = 0x4, scoped, tag = 'scoped memory for tpu_custom_call.1']
    #allocation6 [shape = 'u8[65536]{0}', space=vmem, size = 0x10000, scoped, tag = 'output window, operand 0, single buffered']
    %12 = vsyncpa [#allocation4], 0
    %13 = vsyncpa [#allocation5], 0
    // Predicated region
    $region2: #{tpu_custom_call.1} parent=1 // pred_check
      _
    $region3: #{tpu_custom_call.1} parent=1 // pred_check_branch
      %15 = sbr.rel (0) target = $region5
    $region4: #{tpu_custom_call.1} parent=1 // pred_region
      %17 = vsyncadd [#allocation4], 0
      %s18 = sshll.u32 %s0, 4
      %s19 = int_to_ptr.hbm [resolvable:$true] %s18
      %s20 = sshll.u32 [#allocation3], 4
      %s21 = int_to_ptr.vmem [resolvable:$true] %s20
      %26 = dma.hbm_to_vmem [thread:$0]  %s19, 2048, %s21, [#allocation4], 256, 256, 16
    $region5: #{tpu_custom_call.1} parent=1 // pred_fallthru
      _
    // Predicated region
    $region6: #{tpu_custom_call.1} parent=1 // pred_check
      _
    $region7: #{tpu_custom_call.1} parent=1 // pred_check_branch
      %28 = sbr.rel (0) target = $region9
    $region8: #{tpu_custom_call.1} parent=1 // pred_region
      _
    $region9: #{tpu_custom_call.1} parent=1 // pred_fallthru
      _
    // Predicated region
    $region10: #{tpu_custom_call.1} parent=1 // pred_check
      _
    $region11: #{tpu_custom_call.1} parent=1 // pred_check_branch
      %30 = sbr.rel (0) target = $region13
    $region12: #{tpu_custom_call.1} parent=1 // pred_region
      _
    $region13: #{tpu_custom_call.1} parent=1 // pred_fallthru
      _
    // Predicated region
    $region14: #{tpu_custom_call.1} parent=1 // pred_check
      _
    $region15: #{tpu_custom_call.1} parent=1 // pred_check_branch
      %32 = sbr.rel (0) target = $region17
    $region16: #{tpu_custom_call.1} parent=1 // pred_region
      _
    $region17: #{tpu_custom_call.1} parent=1 // pred_fallthru
      _
    // Predicated region
    $region18: #{tpu_custom_call.1} parent=1 // pred_check
      _
    $region19: #{tpu_custom_call.1} parent=1 // pred_check_branch
      %34 = sbr.rel (0) target = $region21
    $region20: #{tpu_custom_call.1} parent=1 // pred_region
      _
    $region21: #{tpu_custom_call.1} parent=1 // pred_fallthru
      _
    // Predicated region
    $region22: #{tpu_custom_call.1} parent=1 // pred_check
      _
    $region23: #{tpu_custom_call.1} parent=1 // pred_check_branch
      %36 = sbr.rel (0) target = $region25
    $region24: #{tpu_custom_call.1} parent=1 // pred_region
      _
    $region25: #{tpu_custom_call.1} parent=1 // pred_fallthru
      _
    // Predicated region
    $region26: #{tpu_custom_call.1} parent=1 // pred_check
      _
    $region27: #{tpu_custom_call.1} parent=1 // pred_check_branch
      %38 = sbr.rel (0) target = $region29
    $region28: #{tpu_custom_call.1} parent=1 // pred_region
      %40 = dma.done [#allocation4], 2048
    $region29: #{tpu_custom_call.1} parent=1 // pred_fallthru
      _
    %s41 = sld [smem:[#allocation2]]
    %v42 = vld [vmem:[#allocation3] sm:$0xff]
    %v43 = vld [vmem:[#allocation3 + $0x8] sm:$0xff]
    %v44 = vld [vmem:[#allocation3 + $0x10] sm:$0xff]
    %v45 = vld [vmem:[#allocation3 + $0x18] sm:$0xff]
    %v46 = vld [vmem:[#allocation3 + $0x20] sm:$0xff]
    %v47 = vld [vmem:[#allocation3 + $0x28] sm:$0xff]
    %v48 = vld [vmem:[#allocation3 + $0x30] sm:$0xff]
    %v49 = vld [vmem:[#allocation3 + $0x38] sm:$0xff]
    %v50 = vld [vmem:[%s1] sm:$0xff]
    %v51 = vld [vmem:[%s1 + $0x8] sm:$0xff]
    %v52 = vld [vmem:[%s1 + $0x10] sm:$0xff]
    %v53 = vld [vmem:[%s2] sm:$0xff]
    %v54 = vld [vmem:[%s2 + $0x8] sm:$0xff]
    %v55 = vld [vmem:[%s2 + $0x10] sm:$0xff]
    %57 = vset.pattern.permute.xlu0 0
    %58 = vperm.xlu0 %57, %v53
    %v59 = vpop.permute.xlu0 %58
    %62 = vset.pattern.permute.xlu0 0
    %63 = vperm.xlu0 %62, %v54
    %v64 = vpop.permute.xlu0 %63
    %67 = vset.pattern.permute.xlu0 0
    %68 = vperm.xlu0 %67, %v55
    %v69 = vpop.permute.xlu0 %68
    %vm71 = vcmask 261120
    %v73 = vsel %vm71, %v50, 0
    %v76 = vsel %vm71, %v51, 0
    %v79 = vsel %vm71, %v52, 0
    %81 = vmatpush.msra.mxu0 0.0
    %82 = vmatpush.msra.mxu0 0.0
    %83 = vmatpush.msra.mxu0 0.0
    %84 = vmatpush.msra.mxu0 0.0
    %85 = vmatpush.msra.mxu0 0.0
    %86 = vmatpush.msra.mxu0 0.0
    %87 = vmatpush.msra.mxu0 0.0
    %88 = vmatpush.msra.mxu0 0.0
    %89 = vmatpush.msra.mxu0 0.0
    %90 = vmatpush.msra.mxu0 0.0
    %91 = vmatpush.msra.mxu0 0.0
    %92 = vmatpush.msra.mxu0 0.0
    %93 = vmatpush.msra.mxu0 %v48
    %94 = vmatpush.msra.mxu0 %v46
    %95 = vmatpush.msra.mxu0 %v44
    %96 = vmatpush.msra.mxu0 %v42
    %97 = vmatmul.f32.gmra.mxu0 %v73
    %v98 = vpop.f32.mrf.mxu0
    %v99 = vadd.f32 %v59, %v98
    %100 = vmatmul.f32.gmra.mxu0 %v76
    %v101 = vpop.f32.mrf.mxu0
    %v102 = vadd.f32 %v64, %v101
    %103 = vmatmul.f32.gmra.mxu0 %v79
    %v104 = vpop.f32.mrf.mxu0
    %v105 = vadd.f32 %v69, %v104
    %106 = vdwg.mxu0
    %107 = vmatpush.msra.mxu0 0.0
    %108 = vmatpush.msra.mxu0 0.0
    %109 = vmatpush.msra.mxu0 0.0
    %110 = vmatpush.msra.mxu0 0.0
    %111 = vmatpush.msra.mxu0 0.0
    %112 = vmatpush.msra.mxu0 0.0
    %113 = vmatpush.msra.mxu0 0.0
    %114 = vmatpush.msra.mxu0 0.0
    %115 = vmatpush.msra.mxu0 0.0
    %116 = vmatpush.msra.mxu0 0.0
    %117 = vmatpush.msra.mxu0 0.0
    %118 = vmatpush.msra.mxu0 0.0
    %119 = vmatpush.msra.mxu0 %v49
    %120 = vmatpush.msra.mxu0 %v47
    %121 = vmatpush.msra.mxu0 %v45
    %122 = vmatpush.msra.mxu0 %v43
    %123 = vmatmul.f32.gmra.mxu0 %v73
    %v124 = vpop.f32.mrf.mxu0
    %v125 = vadd.f32 %v59, %v124
    %126 = vmatmul.f32.gmra.mxu0 %v76
    %v127 = vpop.f32.mrf.mxu0
    %v128 = vadd.f32 %v64, %v127
    %129 = vmatmul.f32.gmra.mxu0 %v79
    %v130 = vpop.f32.mrf.mxu0
    %v131 = vadd.f32 %v69, %v130
    %132 = vdwg.mxu0
    %133 = vxpose.xlu0.b32.start [1/16] %v102, 128
    %134 = vxpose.xlu0.b32.cont [2/16] 0.0, 128
    %135 = vxpose.xlu0.b32.cont [3/16] 0.0, 128
    %136 = vxpose.xlu0.b32.cont [4/16] 0.0, 128
    %137 = vxpose.xlu0.b32.cont [5/16] 0.0, 128
    %138 = vxpose.xlu0.b32.cont [6/16] 0.0, 128
    %139 = vxpose.xlu0.b32.cont [7/16] 0.0, 128
    %140 = vxpose.xlu0.b32.cont [8/16] 0.0, 128
    %141 = vxpose.xlu0.b32.cont [9/16] 0.0, 128
    %142 = vxpose.xlu0.b32.cont [10/16] 0.0, 128
    %143 = vxpose.xlu0.b32.cont [11/16] 0.0, 128
    %144 = vxpose.xlu0.b32.cont [12/16] 0.0, 128
    %145 = vxpose.xlu0.b32.cont [13/16] 0.0, 128
    %146 = vxpose.xlu0.b32.cont [14/16] 0.0, 128
    %147 = vxpose.xlu0.b32.cont [15/16] 0.0, 128
    %148 = vxpose.xlu0.b32.end [16/16] 0.0, 128
    %v149 = vpop.trf.xlu0
    %v150 = vpop.trf.xlu0
    %v151 = vpop.trf.xlu0
    %v152 = vpop.trf.xlu0
    %v153 = vpop.trf.xlu0
    %v154 = vpop.trf.xlu0
    %v155 = vpop.trf.xlu0
    %v156 = vpop.trf.xlu0
    %v157 = vpop.trf.xlu0
    %v158 = vpop.trf.xlu0
    %v159 = vpop.trf.xlu0
    %v160 = vpop.trf.xlu0
    %v161 = vpop.trf.xlu0
    %v162 = vpop.trf.xlu0
    %v163 = vpop.trf.xlu0
    %v164 = vpop.trf.xlu0
    %165 = vxpose.xlu0.b32.start [1/16] %v128, 128
    %166 = vxpose.xlu0.b32.cont [2/16] 0.0, 128
    %167 = vxpose.xlu0.b32.cont [3/16] 0.0, 128
    %168 = vxpose.xlu0.b32.cont [4/16] 0.0, 128
    %169 = vxpose.xlu0.b32.cont [5/16] 0.0, 128
    %170 = vxpose.xlu0.b32.cont [6/16] 0.0, 128
    %171 = vxpose.xlu0.b32.cont [7/16] 0.0, 128
    %172 = vxpose.xlu0.b32.cont [8/16] 0.0, 128
    %173 = vxpose.xlu0.b32.cont [9/16] 0.0, 128
    %174 = vxpose.xlu0.b32.cont [10/16] 0.0, 128
    %175 = vxpose.xlu0.b32.cont [11/16] 0.0, 128
    %176 = vxpose.xlu0.b32.cont [12/16] 0.0, 128
    %177 = vxpose.xlu0.b32.cont [13/16] 0.0, 128
    %178 = vxpose.xlu0.b32.cont [14/16] 0.0, 128
    %179 = vxpose.xlu0.b32.cont [15/16] 0.0, 128
    %180 = vxpose.xlu0.b32.end [16/16] 0.0, 128
    %v181 = vpop.trf.xlu0
    %v182 = vpop.trf.xlu0
    %v183 = vpop.trf.xlu0
    %v184 = vpop.trf.xlu0
    %v185 = vpop.trf.xlu0
    %v186 = vpop.trf.xlu0
    %v187 = vpop.trf.xlu0
    %v188 = vpop.trf.xlu0
    %v189 = vpop.trf.xlu0
    %v190 = vpop.trf.xlu0
    %v191 = vpop.trf.xlu0
    %v192 = vpop.trf.xlu0
    %v193 = vpop.trf.xlu0
    %v194 = vpop.trf.xlu0
    %v195 = vpop.trf.xlu0
    %v196 = vpop.trf.xlu0
    %vm197 = vcmask 64512
    %v199 = vsel %vm197, %v149, 0
    %v202 = vsel %vm197, %v150, 0
    %v205 = vsel %vm197, %v151, 0
    %v208 = vsel %vm197, %v152, 0
    %v211 = vsel %vm197, %v153, 0
    %v214 = vsel %vm197, %v154, 0
    %v217 = vsel %vm197, %v155, 0
    %v220 = vsel %vm197, %v156, 0
    %v223 = vsel %vm197, %v157, 0
    %v226 = vsel %vm197, %v158, 0
    %v229 = vsel %vm197, %v159, 0
    %v232 = vsel %vm197, %v160, 0
    %v235 = vsel %vm197, %v161, 0
    %v238 = vsel %vm197, %v162, 0
    %v241 = vsel %vm197, %v163, 0
    %v244 = vsel %vm197, %v164, 0
    %v247 = vsel %vm197, %v181, 0
    %v250 = vsel %vm197, %v182, 0
    %v253 = vsel %vm197, %v183, 0
    %v256 = vsel %vm197, %v184, 0
    %v259 = vsel %vm197, %v185, 0
    %v262 = vsel %vm197, %v186, 0
    %v265 = vsel %vm197, %v187, 0
    %v268 = vsel %vm197, %v188, 0
    %v271 = vsel %vm197, %v189, 0
    %v274 = vsel %vm197, %v190, 0
    %v277 = vsel %vm197, %v191, 0
    %v280 = vsel %vm197, %v192, 0
    %v283 = vsel %vm197, %v193, 0
    %v286 = vsel %vm197, %v194, 0
    %v289 = vsel %vm197, %v195, 0
    %v292 = vsel %vm197, %v196, 0
    %294 = vmatpush.msra.mxu0 0.0
    %295 = vmatpush.msra.mxu0 0.0
    %296 = vmatpush.msra.mxu0 0.0
    %297 = vmatpush.msra.mxu0 0.0
    %298 = vmatpush.msra.mxu0 0.0
    %299 = vmatpush.msra.mxu0 0.0
    %300 = vmatpush.msra.mxu0 0.0
    %301 = vmatpush.msra.mxu0 0.0
    %302 = vmatpush.msra.mxu0 0.0
    %303 = vmatpush.msra.mxu0 0.0
    %304 = vmatpush.msra.mxu0 0.0
    %305 = vmatpush.msra.mxu0 0.0
    %306 = vmatpush.msra.mxu0 0.0
    %307 = vmatpush.msra.mxu0 0.0
    %308 = vmatpush.msra.mxu0 0.0
    %309 = vmatpush.msra.mxu0 %v99
    %310 = vmatmul.f32.gmra.mxu0 %v199
    %v311 = vpop.f32.mrf.mxu0
    %v312 = vadd.f32 0.0, %v311
    %313 = vmatmul.f32.gmra.mxu0 %v202
    %v314 = vpop.f32.mrf.mxu0
    %v315 = vadd.f32 0.0, %v314
    %316 = vmatmul.f32.gmra.mxu0 %v205
    %v317 = vpop.f32.mrf.mxu0
    %v318 = vadd.f32 0.0, %v317
    %319 = vmatmul.f32.gmra.mxu0 %v208
    %v320 = vpop.f32.mrf.mxu0
    %v321 = vadd.f32 0.0, %v320
    %322 = vmatmul.f32.gmra.mxu0 %v211
    %v323 = vpop.f32.mrf.mxu0
    %v324 = vadd.f32 0.0, %v323
    %325 = vmatmul.f32.gmra.mxu0 %v214
    %v326 = vpop.f32.mrf.mxu0
    %v327 = vadd.f32 0.0, %v326
    %328 = vmatmul.f32.gmra.mxu0 %v217
    %v329 = vpop.f32.mrf.mxu0
    %v330 = vadd.f32 0.0, %v329
    %331 = vmatmul.f32.gmra.mxu0 %v220
    %v332 = vpop.f32.mrf.mxu0
    %v333 = vadd.f32 0.0, %v332
    %334 = vmatmul.f32.gmra.mxu0 %v223
    %v335 = vpop.f32.mrf.mxu0
    %v336 = vadd.f32 0.0, %v335
    %337 = vmatmul.f32.gmra.mxu0 %v226
    %v338 = vpop.f32.mrf.mxu0
    %v339 = vadd.f32 0.0, %v338
    %340 = vmatmul.f32.gmra.mxu0 %v229
    %v341 = vpop.f32.mrf.mxu0
    %v342 = vadd.f32 0.0, %v341
    %343 = vmatmul.f32.gmra.mxu0 %v232
    %v344 = vpop.f32.mrf.mxu0
    %v345 = vadd.f32 0.0, %v344
    %346 = vmatmul.f32.gmra.mxu0 %v235
    %v347 = vpop.f32.mrf.mxu0
    %v348 = vadd.f32 0.0, %v347
    %349 = vmatmul.f32.gmra.mxu0 %v238
    %v350 = vpop.f32.mrf.mxu0
    %v351 = vadd.f32 0.0, %v350
    %352 = vmatmul.f32.gmra.mxu0 %v241
    %v353 = vpop.f32.mrf.mxu0
    %v354 = vadd.f32 0.0, %v353
    %355 = vmatmul.f32.gmra.mxu0 %v244
    %v356 = vpop.f32.mrf.mxu0
    %v357 = vadd.f32 0.0, %v356
    %358 = vmatmul.f32.gmra.mxu0 %v247
    %v359 = vpop.f32.mrf.mxu0
    %v360 = vadd.f32 0.0, %v359
    %361 = vmatmul.f32.gmra.mxu0 %v250
    %v362 = vpop.f32.mrf.mxu0
    %v363 = vadd.f32 0.0, %v362
    %364 = vmatmul.f32.gmra.mxu0 %v253
    %v365 = vpop.f32.mrf.mxu0
    %v366 = vadd.f32 0.0, %v365
    %367 = vmatmul.f32.gmra.mxu0 %v256
    %v368 = vpop.f32.mrf.mxu0
    %v369 = vadd.f32 0.0, %v368
    %370 = vmatmul.f32.gmra.mxu0 %v259
    %v371 = vpop.f32.mrf.mxu0
    %v372 = vadd.f32 0.0, %v371
    %373 = vmatmul.f32.gmra.mxu0 %v262
    %v374 = vpop.f32.mrf.mxu0
    %v375 = vadd.f32 0.0, %v374
    %376 = vmatmul.f32.gmra.mxu0 %v265
    %v377 = vpop.f32.mrf.mxu0
    %v378 = vadd.f32 0.0, %v377
    %379 = vmatmul.f32.gmra.mxu0 %v268
    %v380 = vpop.f32.mrf.mxu0
    %v381 = vadd.f32 0.0, %v380
    %382 = vmatmul.f32.gmra.mxu0 %v271
    %v383 = vpop.f32.mrf.mxu0
    %v384 = vadd.f32 0.0, %v383
    %385 = vmatmul.f32.gmra.mxu0 %v274
    %v386 = vpop.f32.mrf.mxu0
    %v387 = vadd.f32 0.0, %v386
    %388 = vmatmul.f32.gmra.mxu0 %v277
    %v389 = vpop.f32.mrf.mxu0
    %v390 = vadd.f32 0.0, %v389
    %391 = vmatmul.f32.gmra.mxu0 %v280
    %v392 = vpop.f32.mrf.mxu0
    %v393 = vadd.f32 0.0, %v392
    %394 = vmatmul.f32.gmra.mxu0 %v283
    %v395 = vpop.f32.mrf.mxu0
    %v396 = vadd.f32 0.0, %v395
    %397 = vmatmul.f32.gmra.mxu0 %v286
    %v398 = vpop.f32.mrf.mxu0
    %v399 = vadd.f32 0.0, %v398
    %400 = vmatmul.f32.gmra.mxu0 %v289
    %v401 = vpop.f32.mrf.mxu0
    %v402 = vadd.f32 0.0, %v401
    %403 = vmatmul.f32.gmra.mxu0 %v292
    %v404 = vpop.f32.mrf.mxu0
    %v405 = vadd.f32 0.0, %v404
    %406 = vdwg.mxu0
    %407 = vmatpush.msra.mxu0 0.0
    %408 = vmatpush.msra.mxu0 0.0
    %409 = vmatpush.msra.mxu0 0.0
    %410 = vmatpush.msra.mxu0 0.0
    %411 = vmatpush.msra.mxu0 0.0
    %412 = vmatpush.msra.mxu0 0.0
    %413 = vmatpush.msra.mxu0 0.0
    %414 = vmatpush.msra.mxu0 0.0
    %415 = vmatpush.msra.mxu0 0.0
    %416 = vmatpush.msra.mxu0 0.0
    %417 = vmatpush.msra.mxu0 0.0
    %418 = vmatpush.msra.mxu0 0.0
    %419 = vmatpush.msra.mxu0 0.0
    %420 = vmatpush.msra.mxu0 0.0
    %421 = vmatpush.msra.mxu0 0.0
    %422 = vmatpush.msra.mxu0 %v125
    %423 = vmatmul.f32.gmra.mxu0 %v199
    %v424 = vpop.f32.mrf.mxu0
    %v425 = vadd.f32 0.0, %v424
    %426 = vmatmul.f32.gmra.mxu0 %v202
    %v427 = vpop.f32.mrf.mxu0
    %v428 = vadd.f32 0.0, %v427
    %429 = vmatmul.f32.gmra.mxu0 %v205
    %v430 = vpop.f32.mrf.mxu0
    %v431 = vadd.f32 0.0, %v430
    %432 = vmatmul.f32.gmra.mxu0 %v208
    %v433 = vpop.f32.mrf.mxu0
    %v434 = vadd.f32 0.0, %v433
    %435 = vmatmul.f32.gmra.mxu0 %v211
    %v436 = vpop.f32.mrf.mxu0
    %v437 = vadd.f32 0.0, %v436
    %438 = vmatmul.f32.gmra.mxu0 %v214
    %v439 = vpop.f32.mrf.mxu0
    %v440 = vadd.f32 0.0, %v439
    %441 = vmatmul.f32.gmra.mxu0 %v217
    %v442 = vpop.f32.mrf.mxu0
    %v443 = vadd.f32 0.0, %v442
    %444 = vmatmul.f32.gmra.mxu0 %v220
    %v445 = vpop.f32.mrf.mxu0
    %v446 = vadd.f32 0.0, %v445
    %447 = vmatmul.f32.gmra.mxu0 %v223
    %v448 = vpop.f32.mrf.mxu0
    %v449 = vadd.f32 0.0, %v448
    %450 = vmatmul.f32.gmra.mxu0 %v226
    %v451 = vpop.f32.mrf.mxu0
    %v452 = vadd.f32 0.0, %v451
    %453 = vmatmul.f32.gmra.mxu0 %v229
    %v454 = vpop.f32.mrf.mxu0
    %v455 = vadd.f32 0.0, %v454
    %456 = vmatmul.f32.gmra.mxu0 %v232
    %v457 = vpop.f32.mrf.mxu0
    %v458 = vadd.f32 0.0, %v457
    %459 = vmatmul.f32.gmra.mxu0 %v235
    %v460 = vpop.f32.mrf.mxu0
    %v461 = vadd.f32 0.0, %v460
    %462 = vmatmul.f32.gmra.mxu0 %v238
    %v463 = vpop.f32.mrf.mxu0
    %v464 = vadd.f32 0.0, %v463
    %465 = vmatmul.f32.gmra.mxu0 %v241
    %v466 = vpop.f32.mrf.mxu0
    %v467 = vadd.f32 0.0, %v466
    %468 = vmatmul.f32.gmra.mxu0 %v244
    %v469 = vpop.f32.mrf.mxu0
    %v470 = vadd.f32 0.0, %v469
    %471 = vmatmul.f32.gmra.mxu0 %v247
    %v472 = vpop.f32.mrf.mxu0
    %v473 = vadd.f32 0.0, %v472
    %474 = vmatmul.f32.gmra.mxu0 %v250
    %v475 = vpop.f32.mrf.mxu0
    %v476 = vadd.f32 0.0, %v475
    %477 = vmatmul.f32.gmra.mxu0 %v253
    %v478 = vpop.f32.mrf.mxu0
    %v479 = vadd.f32 0.0, %v478
    %480 = vmatmul.f32.gmra.mxu0 %v256
    %v481 = vpop.f32.mrf.mxu0
    %v482 = vadd.f32 0.0, %v481
    %483 = vmatmul.f32.gmra.mxu0 %v259
    %v484 = vpop.f32.mrf.mxu0
    %v485 = vadd.f32 0.0, %v484
    %486 = vmatmul.f32.gmra.mxu0 %v262
    %v487 = vpop.f32.mrf.mxu0
    %v488 = vadd.f32 0.0, %v487
    %489 = vmatmul.f32.gmra.mxu0 %v265
    %v490 = vpop.f32.mrf.mxu0
    %v491 = vadd.f32 0.0, %v490
    %492 = vmatmul.f32.gmra.mxu0 %v268
    %v493 = vpop.f32.mrf.mxu0
    %v494 = vadd.f32 0.0, %v493
    %495 = vmatmul.f32.gmra.mxu0 %v271
    %v496 = vpop.f32.mrf.mxu0
    %v497 = vadd.f32 0.0, %v496
    %498 = vmatmul.f32.gmra.mxu0 %v274
    %v499 = vpop.f32.mrf.mxu0
    %v500 = vadd.f32 0.0, %v499
    %501 = vmatmul.f32.gmra.mxu0 %v277
    %v502 = vpop.f32.mrf.mxu0
    %v503 = vadd.f32 0.0, %v502
    %504 = vmatmul.f32.gmra.mxu0 %v280
    %v505 = vpop.f32.mrf.mxu0
    %v506 = vadd.f32 0.0, %v505
    %507 = vmatmul.f32.gmra.mxu0 %v283
    %v508 = vpop.f32.mrf.mxu0
    %v509 = vadd.f32 0.0, %v508
    %510 = vmatmul.f32.gmra.mxu0 %v286
    %v511 = vpop.f32.mrf.mxu0
    %v512 = vadd.f32 0.0, %v511
    %513 = vmatmul.f32.gmra.mxu0 %v289
    %v514 = vpop.f32.mrf.mxu0
    %v515 = vadd.f32 0.0, %v514
    %516 = vmatmul.f32.gmra.mxu0 %v292
    %v517 = vpop.f32.mrf.mxu0
    %v518 = vadd.f32 0.0, %v517
    %519 = vdwg.mxu0
    %v520 = vmax.f32 %v312, %v318
    %v521 = vmax.f32 %v315, %v321
    %v522 = vmax.f32 %v520, %v324
    %v523 = vmax.f32 %v521, %v327
    %v524 = vmax.f32 %v522, %v330
    %v525 = vmax.f32 %v523, %v333
    %v526 = vmax.f32 %v524, %v336
    %v527 = vmax.f32 %v525, %v339
    %v528 = vmax.f32 %v526, %v342
    %v529 = vmax.f32 %v527, %v345
    %v530 = vmax.f32 %v528, %v348
    %v531 = vmax.f32 %v529, %v351
    %v532 = vmax.f32 %v530, %v354
    %v533 = vmax.f32 %v531, %v357
    %v534 = vmax.f32 %v532, %v360
    %v535 = vmax.f32 %v533, %v363
    %v536 = vmax.f32 %v534, %v366
    %v537 = vmax.f32 %v535, %v369
    %v538 = vmax.f32 %v536, %v372
    %v539 = vmax.f32 %v537, %v375
    %v540 = vmax.f32 %v538, %v378
    %v541 = vmax.f32 %v539, %v381
    %v542 = vmax.f32 %v540, %v384
    %v543 = vmax.f32 %v541, %v387
    %v544 = vmax.f32 %v542, %v390
    %v545 = vmax.f32 %v543, %v393
    %v546 = vmax.f32 %v544, %v396
    %v547 = vmax.f32 %v545, %v399
    %v548 = vmax.f32 %v546, %v402
    %v549 = vmax.f32 %v547, %v405
    %v550 = vmax.f32 %v548, %v549
    %v551 = vrot.slane %v550, 4
    %v552 = vmax.f32 %v550, %v551
    %v553 = vrot.slane %v552, 2
    %v554 = vmax.f32 %v552, %v553
    %v555 = vrot.slane %v554, 1
    %v556 = vmax.f32 %v554, %v555
    %v557 = vmax.f32 %v425, %v431
    %v558 = vmax.f32 %v428, %v434
    %v559 = vmax.f32 %v557, %v437
    %v560 = vmax.f32 %v558, %v440
    %v561 = vmax.f32 %v559, %v443
    %v562 = vmax.f32 %v560, %v446
    %v563 = vmax.f32 %v561, %v449
    %v564 = vmax.f32 %v562, %v452
    %v565 = vmax.f32 %v563, %v455
    %v566 = vmax.f32 %v564, %v458
    %v567 = vmax.f32 %v565, %v461
    %v568 = vmax.f32 %v566, %v464
    %v569 = vmax.f32 %v567, %v467
    %v570 = vmax.f32 %v568, %v470
    %v571 = vmax.f32 %v569, %v473
    %v572 = vmax.f32 %v570, %v476
    %v573 = vmax.f32 %v571, %v479
    %v574 = vmax.f32 %v572, %v482
    %v575 = vmax.f32 %v573, %v485
    %v576 = vmax.f32 %v574, %v488
    %v577 = vmax.f32 %v575, %v491
    %v578 = vmax.f32 %v576, %v494
    %v579 = vmax.f32 %v577, %v497
    %v580 = vmax.f32 %v578, %v500
    %v581 = vmax.f32 %v579, %v503
    %v582 = vmax.f32 %v580, %v506
    %v583 = vmax.f32 %v581, %v509
    %v584 = vmax.f32 %v582, %v512
    %v585 = vmax.f32 %v583, %v515
    %v586 = vmax.f32 %v584, %v518
    %v587 = vmax.f32 %v585, %v586
    %v588 = vrot.slane %v587, 4
    %v589 = vmax.f32 %v587, %v588
    %v590 = vrot.slane %v589, 2
    %v591 = vmax.f32 %v589, %v590
    %v592 = vrot.slane %v591, 1
    %v593 = vmax.f32 %v591, %v592
    %v594 = vsub.f32 %v312, %v556
    %v595 = vsub.f32 %v425, %v593
    %v596 = vsub.f32 %v315, %v556
    %v597 = vsub.f32 %v428, %v593
    %v598 = vsub.f32 %v318, %v556
    %v599 = vsub.f32 %v431, %v593
    %v600 = vsub.f32 %v321, %v556
    %v601 = vsub.f32 %v434, %v593
    %v602 = vsub.f32 %v324, %v556
    %v603 = vsub.f32 %v437, %v593
    %v604 = vsub.f32 %v327, %v556
    %v605 = vsub.f32 %v440, %v593
    %v606 = vsub.f32 %v330, %v556
    %v607 = vsub.f32 %v443, %v593
    %v608 = vsub.f32 %v333, %v556
    %v609 = vsub.f32 %v446, %v593
    %v610 = vsub.f32 %v336, %v556
    %v611 = vsub.f32 %v449, %v593
    %v612 = vsub.f32 %v339, %v556
    %v613 = vsub.f32 %v452, %v593
    %v614 = vsub.f32 %v342, %v556
    %v615 = vsub.f32 %v455, %v593
    %v616 = vsub.f32 %v345, %v556
    %v617 = vsub.f32 %v458, %v593
    %v618 = vsub.f32 %v348, %v556
    %v619 = vsub.f32 %v461, %v593
    %v620 = vsub.f32 %v351, %v556
    %v621 = vsub.f32 %v464, %v593
    %v622 = vsub.f32 %v354, %v556
    %v623 = vsub.f32 %v467, %v593
    %v624 = vsub.f32 %v357, %v556
    %v625 = vsub.f32 %v470, %v593
    %v626 = vsub.f32 %v360, %v556
    %v627 = vsub.f32 %v473, %v593
    %v628 = vsub.f32 %v363, %v556
    %v629 = vsub.f32 %v476, %v593
    %v630 = vsub.f32 %v366, %v556
    %v631 = vsub.f32 %v479, %v593
    %v632 = vsub.f32 %v369, %v556
    %v633 = vsub.f32 %v482, %v593
    %v634 = vsub.f32 %v372, %v556
    %v635 = vsub.f32 %v485, %v593
    %v636 = vsub.f32 %v375, %v556
    %v637 = vsub.f32 %v488, %v593
    %v638 = vsub.f32 %v378, %v556
    %v639 = vsub.f32 %v491, %v593
    %v640 = vsub.f32 %v381, %v556
    %v641 = vsub.f32 %v494, %v593
    %v642 = vsub.f32 %v384, %v556
    %v643 = vsub.f32 %v497, %v593
    %v644 = vsub.f32 %v387, %v556
    %v645 = vsub.f32 %v500, %v593
    %v646 = vsub.f32 %v390, %v556
    %v647 = vsub.f32 %v503, %v593
    %v648 = vsub.f32 %v393, %v556
    %v649 = vsub.f32 %v506, %v593
    %v650 = vsub.f32 %v396, %v556
    %v651 = vsub.f32 %v509, %v593
    %v652 = vsub.f32 %v399, %v556
    %v653 = vsub.f32 %v512, %v593
    %v654 = vsub.f32 %v402, %v556
    %v655 = vsub.f32 %v515, %v593
    %v656 = vsub.f32 %v405, %v556
    %v657 = vsub.f32 %v518, %v593
    %v658 = vmul.f32 %v594, 1.442695
    %v659 = vpow.pop %v658
    %v660 = vmul.f32 %v595, 1.442695
    %v661 = vpow.pop %v660
    %v662 = vmul.f32 %v596, 1.442695
    %v663 = vpow.pop %v662
    %v664 = vmul.f32 %v597, 1.442695
    %v665 = vpow.pop %v664
    %v666 = vmul.f32 %v598, 1.442695
    %v667 = vpow.pop %v666
    %v668 = vmul.f32 %v599, 1.442695
    %v669 = vpow.pop %v668
    %v670 = vmul.f32 %v600, 1.442695
    %v671 = vpow.pop %v670
    %v672 = vmul.f32 %v601, 1.442695
    %v673 = vpow.pop %v672
    %v674 = vmul.f32 %v602, 1.442695
    %v675 = vpow.pop %v674
    %v676 = vmul.f32 %v603, 1.442695
    %v677 = vpow.pop %v676
    %v678 = vmul.f32 %v604, 1.442695
    %v679 = vpow.pop %v678
    %v680 = vmul.f32 %v605, 1.442695
    %v681 = vpow.pop %v680
    %v682 = vmul.f32 %v606, 1.442695
    %v683 = vpow.pop %v682
    %v684 = vmul.f32 %v607, 1.442695
    %v685 = vpow.pop %v684
    %v686 = vmul.f32 %v608, 1.442695
    %v687 = vpow.pop %v686
    %v688 = vmul.f32 %v609, 1.442695
    %v689 = vpow.pop %v688
    %v690 = vmul.f32 %v610, 1.442695
    %v691 = vpow.pop %v690
    %v692 = vmul.f32 %v611, 1.442695
    %v693 = vpow.pop %v692
    %v694 = vmul.f32 %v612, 1.442695
    %v695 = vpow.pop %v694
    %v696 = vmul.f32 %v613, 1.442695
    %v697 = vpow.pop %v696
    %v698 = vmul.f32 %v614, 1.442695
    %v699 = vpow.pop %v698
    %v700 = vmul.f32 %v615, 1.442695
    %v701 = vpow.pop %v700
    %v702 = vmul.f32 %v616, 1.442695
    %v703 = vpow.pop %v702
    %v704 = vmul.f32 %v617, 1.442695
    %v705 = vpow.pop %v704
    %v706 = vmul.f32 %v618, 1.442695
    %v707 = vpow.pop %v706
    %v708 = vmul.f32 %v619, 1.442695
    %v709 = vpow.pop %v708
    %v710 = vmul.f32 %v620, 1.442695
    %v711 = vpow.pop %v710
    %v712 = vmul.f32 %v621, 1.442695
    %v713 = vpow.pop %v712
    %v714 = vmul.f32 %v622, 1.442695
    %v715 = vpow.pop %v714
    %v716 = vmul.f32 %v623, 1.442695
    %v717 = vpow.pop %v716
    %v718 = vmul.f32 %v624, 1.442695
    %v719 = vpow.pop %v718
    %v720 = vmul.f32 %v625, 1.442695
    %v721 = vpow.pop %v720
    %v722 = vmul.f32 %v626, 1.442695
    %v723 = vpow.pop %v722
    %v724 = vmul.f32 %v627, 1.442695
    %v725 = vpow.pop %v724
    %v726 = vmul.f32 %v628, 1.442695
    %v727 = vpow.pop %v726
    %v728 = vmul.f32 %v629, 1.442695
    %v729 = vpow.pop %v728
    %v730 = vmul.f32 %v630, 1.442695
    %v731 = vpow.pop %v730
    %v732 = vmul.f32 %v631, 1.442695
    %v733 = vpow.pop %v732
    %v734 = vmul.f32 %v632, 1.442695
    %v735 = vpow.pop %v734
    %v736 = vmul.f32 %v633, 1.442695
    %v737 = vpow.pop %v736
    %v738 = vmul.f32 %v634, 1.442695
    %v739 = vpow.pop %v738
    %v740 = vmul.f32 %v635, 1.442695
    %v741 = vpow.pop %v740
    %v742 = vmul.f32 %v636, 1.442695
    %v743 = vpow.pop %v742
    %v744 = vmul.f32 %v637, 1.442695
    %v745 = vpow.pop %v744
    %v746 = vmul.f32 %v638, 1.442695
    %v747 = vpow.pop %v746
    %v748 = vmul.f32 %v639, 1.442695
    %v749 = vpow.pop %v748
    %v750 = vmul.f32 %v640, 1.442695
    %v751 = vpow.pop %v750
    %v752 = vmul.f32 %v641, 1.442695
    %v753 = vpow.pop %v752
    %v754 = vmul.f32 %v642, 1.442695
    %v755 = vpow.pop %v754
    %v756 = vmul.f32 %v643, 1.442695
    %v757 = vpow.pop %v756
    %v758 = vmul.f32 %v644, 1.442695
    %v759 = vpow.pop %v758
    %v760 = vmul.f32 %v645, 1.442695
    %v761 = vpow.pop %v760
    %v762 = vmul.f32 %v646, 1.442695
    %v763 = vpow.pop %v762
    %v764 = vmul.f32 %v647, 1.442695
    %v765 = vpow.pop %v764
    %v766 = vmul.f32 %v648, 1.442695
    %v767 = vpow.pop %v766
    %v768 = vmul.f32 %v649, 1.442695
    %v769 = vpow.pop %v768
    %v770 = vmul.f32 %v650, 1.442695
    %v771 = vpow.pop %v770
    %v772 = vmul.f32 %v651, 1.442695
    %v773 = vpow.pop %v772
    %v774 = vmul.f32 %v652, 1.442695
    %v775 = vpow.pop %v774
    %v776 = vmul.f32 %v653, 1.442695
    %v777 = vpow.pop %v776
    %v778 = vmul.f32 %v654, 1.442695
    %v779 = vpow.pop %v778
    %v780 = vmul.f32 %v655, 1.442695
    %v781 = vpow.pop %v780
    %v782 = vmul.f32 %v656, 1.442695
    %v783 = vpow.pop %v782
    %v784 = vmul.f32 %v657, 1.442695
    %v785 = vpow.pop %v784
    %v786 = vadd.f32 %v659, %v663
    %v787 = vadd.f32 %v786, %v667
    %v788 = vadd.f32 %v787, %v671
    %v789 = vadd.f32 %v788, %v675
    %v790 = vadd.f32 %v789, %v679
    %v791 = vadd.f32 %v790, %v683
    %v792 = vadd.f32 %v791, %v687
    %v793 = vadd.f32 %v792, %v691
    %v794 = vadd.f32 %v793, %v695
    %v795 = vadd.f32 %v794, %v699
    %v796 = vadd.f32 %v795, %v703
    %v797 = vadd.f32 %v796, %v707
    %v798 = vadd.f32 %v797, %v711
    %v799 = vadd.f32 %v798, %v715
    %v800 = vadd.f32 %v799, %v719
    %v801 = vadd.f32 %v800, %v723
    %v802 = vadd.f32 %v801, %v727
    %v803 = vadd.f32 %v802, %v731
    %v804 = vadd.f32 %v803, %v735
    %v805 = vadd.f32 %v804, %v739
    %v806 = vadd.f32 %v805, %v743
    %v807 = vadd.f32 %v806, %v747
    %v808 = vadd.f32 %v807, %v751
    %v809 = vadd.f32 %v808, %v755
    %v810 = vadd.f32 %v809, %v759
    %v811 = vadd.f32 %v810, %v763
    %v812 = vadd.f32 %v811, %v767
    %v813 = vadd.f32 %v812, %v771
    %v814 = vadd.f32 %v813, %v775
    %v815 = vadd.f32 %v814, %v779
    %v816 = vadd.f32 %v815, %v783
    %v817 = vrot.slane %v816, 4
    %v818 = vadd.f32 %v816, %v817
    %v819 = vrot.slane %v818, 2
    %v820 = vadd.f32 %v818, %v819
    %v821 = vrot.slane %v820, 1
    %v822 = vadd.f32 %v820, %v821
    %v823 = vadd.f32 %v661, %v665
    %v824 = vadd.f32 %v823, %v669
    %v825 = vadd.f32 %v824, %v673
    %v826 = vadd.f32 %v825, %v677
    %v827 = vadd.f32 %v826, %v681
    %v828 = vadd.f32 %v827, %v685
    %v829 = vadd.f32 %v828, %v689
    %v830 = vadd.f32 %v829, %v693
    %v831 = vadd.f32 %v830, %v697
    %v832 = vadd.f32 %v831, %v701
    %v833 = vadd.f32 %v832, %v705
    %v834 = vadd.f32 %v833, %v709
    %v835 = vadd.f32 %v834, %v713
    %v836 = vadd.f32 %v835, %v717
    %v837 = vadd.f32 %v836, %v721
    %v838 = vadd.f32 %v837, %v725
    %v839 = vadd.f32 %v838, %v729
    %v840 = vadd.f32 %v839, %v733
    %v841 = vadd.f32 %v840, %v737
    %v842 = vadd.f32 %v841, %v741
    %v843 = vadd.f32 %v842, %v745
    %v844 = vadd.f32 %v843, %v749
    %v845 = vadd.f32 %v844, %v753
    %v846 = vadd.f32 %v845, %v757
    %v847 = vadd.f32 %v846, %v761
    %v848 = vadd.f32 %v847, %v765
    %v849 = vadd.f32 %v848, %v769
    %v850 = vadd.f32 %v849, %v773
    %v851 = vadd.f32 %v850, %v777
    %v852 = vadd.f32 %v851, %v781
    %v853 = vadd.f32 %v852, %v785
    %v854 = vrot.slane %v853, 4
    %v855 = vadd.f32 %v853, %v854
    %v856 = vrot.slane %v855, 2
    %v857 = vadd.f32 %v855, %v856
    %v858 = vrot.slane %v857, 1
    %v859 = vadd.f32 %v857, %v858
    %v860 = vrcp.pop %v822
    %v861 = vmul.f32 %v822, %v860
    %v862 = vsub.f32 1.0, %v861
    %v863 = vmul.f32 %v860, %v862
    %v864 = vadd.f32 %v860, %v863
    %vm865 = vweird.f32 %v822
    %vm866 = vweird.f32 %v860
    %vm867 = vmor %vm865, %vm866
    %v868 = vsel %vm867, %v860, %v864
    %v869 = vand.u32 2147483647, %v822
    %vm870 = vcmp.eq.f32.partialorder %v869, 8.507059e+37
    %v871 = vand.u32 %v822, 2147483648
    %v872 = vor.u32 1.1754944e-38, %v871
    %v873 = vsel %vm870, %v872, %v868
    %v874 = vrcp.pop %v859
    %v875 = vmul.f32 %v859, %v874
    %v876 = vsub.f32 1.0, %v875
    %v877 = vmul.f32 %v874, %v876
    %v878 = vadd.f32 %v874, %v877
    %vm879 = vweird.f32 %v859
    %vm880 = vweird.f32 %v874
    %vm881 = vmor %vm879, %vm880
    %v882 = vsel %vm881, %v874, %v878
    %v883 = vand.u32 2147483647, %v859
    %vm884 = vcmp.eq.f32.partialorder %v883, 8.507059e+37
    %v885 = vand.u32 %v859, 2147483648
    %v886 = vor.u32 1.1754944e-38, %v885
    %v887 = vsel %vm884, %v886, %v882
    %v888 = vmul.f32 %v659, %v873
    %v889 = vmul.f32 %v661, %v887
    %v890 = vmul.f32 %v663, %v873
    %v891 = vmul.f32 %v665, %v887
    %v892 = vmul.f32 %v667, %v873
    %v893 = vmul.f32 %v669, %v887
    %v894 = vmul.f32 %v671, %v873
    %v895 = vmul.f32 %v673, %v887
    %v896 = vmul.f32 %v675, %v873
    %v897 = vmul.f32 %v677, %v887
    %v898 = vmul.f32 %v679, %v873
    %v899 = vmul.f32 %v681, %v887
    %v900 = vmul.f32 %v683, %v873
    %v901 = vmul.f32 %v685, %v887
    %v902 = vmul.f32 %v687, %v873
    %v903 = vmul.f32 %v689, %v887
    %v904 = vmul.f32 %v691, %v873
    %v905 = vmul.f32 %v693, %v887
    %v906 = vmul.f32 %v695, %v873
    %v907 = vmul.f32 %v697, %v887
    %v908 = vmul.f32 %v699, %v873
    %v909 = vmul.f32 %v701, %v887
    %v910 = vmul.f32 %v703, %v873
    %v911 = vmul.f32 %v705, %v887
    %v912 = vmul.f32 %v707, %v873
    %v913 = vmul.f32 %v709, %v887
    %v914 = vmul.f32 %v711, %v873
    %v915 = vmul.f32 %v713, %v887
    %v916 = vmul.f32 %v715, %v873
    %v917 = vmul.f32 %v717, %v887
    %v918 = vmul.f32 %v719, %v873
    %v919 = vmul.f32 %v721, %v887
    %v920 = vmul.f32 %v723, %v873
    %v921 = vmul.f32 %v725, %v887
    %v922 = vmul.f32 %v727, %v873
    %v923 = vmul.f32 %v729, %v887
    %v924 = vmul.f32 %v731, %v873
    %v925 = vmul.f32 %v733, %v887
    %v926 = vmul.f32 %v735, %v873
    %v927 = vmul.f32 %v737, %v887
    %v928 = vmul.f32 %v739, %v873
    %v929 = vmul.f32 %v741, %v887
    %v930 = vmul.f32 %v743, %v873
    %v931 = vmul.f32 %v745, %v887
    %v932 = vmul.f32 %v747, %v873
    %v933 = vmul.f32 %v749, %v887
    %v934 = vmul.f32 %v751, %v873
    %v935 = vmul.f32 %v753, %v887
    %v936 = vmul.f32 %v755, %v873
    %v937 = vmul.f32 %v757, %v887
    %v938 = vmul.f32 %v759, %v873
    %v939 = vmul.f32 %v761, %v887
    %v940 = vmul.f32 %v763, %v873
    %v941 = vmul.f32 %v765, %v887
    %v942 = vmul.f32 %v767, %v873
    %v943 = vmul.f32 %v769, %v887
    %v944 = vmul.f32 %v771, %v873
    %v945 = vmul.f32 %v773, %v887
    %v946 = vmul.f32 %v775, %v873
    %v947 = vmul.f32 %v777, %v887
    %v948 = vmul.f32 %v779, %v873
    %v949 = vmul.f32 %v781, %v887
    %v950 = vmul.f32 %v783, %v873
    %v951 = vmul.f32 %v785, %v887
    %952 = vmatpush.msra.mxu0 %v918
    %953 = vmatpush.msra.mxu0 %v916
    %954 = vmatpush.msra.mxu0 %v914
    %955 = vmatpush.msra.mxu0 %v912
    %956 = vmatpush.msra.mxu0 %v910
    %957 = vmatpush.msra.mxu0 %v908
    %958 = vmatpush.msra.mxu0 %v906
    %959 = vmatpush.msra.mxu0 %v904
    %960 = vmatpush.msra.mxu0 %v902
    %961 = vmatpush.msra.mxu0 %v900
    %962 = vmatpush.msra.mxu0 %v898
    %963 = vmatpush.msra.mxu0 %v896
    %964 = vmatpush.msra.mxu0 %v894
    %965 = vmatpush.msra.mxu0 %v892
    %966 = vmatpush.msra.mxu0 %v890
    %967 = vmatpush.msra.mxu0 %v888
    %968 = vmatmul.f32.gmra.mxu0 %v105
    %v969 = vpop.f32.mrf.mxu0
    %v970 = vadd.f32 0.0, %v969
    %971 = vdwg.mxu0
    %972 = vmatpush.msra.mxu0 %v950
    %973 = vmatpush.msra.mxu0 %v948
    %974 = vmatpush.msra.mxu0 %v946
    %975 = vmatpush.msra.mxu0 %v944
    %976 = vmatpush.msra.mxu0 %v942
    %977 = vmatpush.msra.mxu0 %v940
    %978 = vmatpush.msra.mxu0 %v938
    %979 = vmatpush.msra.mxu0 %v936
    %980 = vmatpush.msra.mxu0 %v934
    %981 = vmatpush.msra.mxu0 %v932
    %982 = vmatpush.msra.mxu0 %v930
    %983 = vmatpush.msra.mxu0 %v928
    %984 = vmatpush.msra.mxu0 %v926
    %985 = vmatpush.msra.mxu0 %v924
    %986 = vmatpush.msra.mxu0 %v922
    %987 = vmatpush.msra.mxu0 %v920
    %988 = vmatmul.f32.gmra.mxu0 %v131
    %v989 = vpop.f32.mrf.mxu0
    %v990 = vadd.f32 %v970, %v989
    %991 = vdwg.mxu0
    %992 = vmatpush.msra.mxu0 %v919
    %993 = vmatpush.msra.mxu0 %v917
    %994 = vmatpush.msra.mxu0 %v915
    %995 = vmatpush.msra.mxu0 %v913
    %996 = vmatpush.msra.mxu0 %v911
    %997 = vmatpush.msra.mxu0 %v909
    %998 = vmatpush.msra.mxu0 %v907
    %999 = vmatpush.msra.mxu0 %v905
    %1000 = vmatpush.msra.mxu0 %v903
    %1001 = vmatpush.msra.mxu0 %v901
    %1002 = vmatpush.msra.mxu0 %v899
    %1003 = vmatpush.msra.mxu0 %v897
    %1004 = vmatpush.msra.mxu0 %v895
    %1005 = vmatpush.msra.mxu0 %v893
    %1006 = vmatpush.msra.mxu0 %v891
    %1007 = vmatpush.msra.mxu0 %v889
    %1008 = vmatmul.f32.gmra.mxu0 %v105
    %v1009 = vpop.f32.mrf.mxu0
    %v1010 = vadd.f32 0.0, %v1009
    %1011 = vdwg.mxu0
    %1012 = vmatpush.msra.mxu0 %v951
    %1013 = vmatpush.msra.mxu0 %v949
    %1014 = vmatpush.msra.mxu0 %v947
    %1015 = vmatpush.msra.mxu0 %v945
    %1016 = vmatpush.msra.mxu0 %v943
    %1017 = vmatpush.msra.mxu0 %v941
    %1018 = vmatpush.msra.mxu0 %v939
    %1019 = vmatpush.msra.mxu0 %v937
    %1020 = vmatpush.msra.mxu0 %v935
    %1021 = vmatpush.msra.mxu0 %v933
    %1022 = vmatpush.msra.mxu0 %v931
    %1023 = vmatpush.msra.mxu0 %v929
    %1024 = vmatpush.msra.mxu0 %v927
    %1025 = vmatpush.msra.mxu0 %v925
    %1026 = vmatpush.msra.mxu0 %v923
    %1027 = vmatpush.msra.mxu0 %v921
    %1028 = vmatmul.f32.gmra.mxu0 %v131
    %v1029 = vpop.f32.mrf.mxu0
    %v1030 = vadd.f32 %v1010, %v1029
    %1031 = vdwg.mxu0
    %v1032 = vld [vmem:[%s3] sm:$0xff]
    %v1033 = vld [vmem:[%s3 + $0x8] sm:$0xff]
    %v1034 = vld [vmem:[%s3 + $0x10] sm:$0xff]
    %v1035 = vld [vmem:[%s3 + $0x18] sm:$0xff]
    %v1036 = vld [vmem:[%s4] sm:$0xff]
    %v1037 = vld [vmem:[%s4 + $0x8] sm:$0xff]
    %v1038 = vld [vmem:[%s4 + $0x10] sm:$0xff]
    %v1039 = vld [vmem:[%s4 + $0x18] sm:$0xff]
    %1041 = vset.pattern.permute.xlu0 0
    %1042 = vperm.xlu0 %1041, %v1036
    %v1043 = vpop.permute.xlu0 %1042
    %1046 = vset.pattern.permute.xlu0 0
    %1047 = vperm.xlu0 %1046, %v1037
    %v1048 = vpop.permute.xlu0 %1047
    %1051 = vset.pattern.permute.xlu0 0
    %1052 = vperm.xlu0 %1051, %v1038
    %v1053 = vpop.permute.xlu0 %1052
    %1056 = vset.pattern.permute.xlu0 0
    %1057 = vperm.xlu0 %1056, %v1039
    %v1058 = vpop.permute.xlu0 %1057
    %v1061 = vsel %vm197, %v1032, 0
    %v1064 = vsel %vm197, %v1033, 0
    %v1067 = vsel %vm197, %v1034, 0
    %v1070 = vsel %vm197, %v1035, 0
    %1072 = vmatpush.msra.mxu0 0.0
    %1073 = vmatpush.msra.mxu0 0.0
    %1074 = vmatpush.msra.mxu0 0.0
    %1075 = vmatpush.msra.mxu0 0.0
    %1076 = vmatpush.msra.mxu0 0.0
    %1077 = vmatpush.msra.mxu0 0.0
    %1078 = vmatpush.msra.mxu0 0.0
    %1079 = vmatpush.msra.mxu0 0.0
    %1080 = vmatpush.msra.mxu0 0.0
    %1081 = vmatpush.msra.mxu0 0.0
    %1082 = vmatpush.msra.mxu0 0.0
    %1083 = vmatpush.msra.mxu0 0.0
    %1084 = vmatpush.msra.mxu0 0.0
    %1085 = vmatpush.msra.mxu0 0.0
    %1086 = vmatpush.msra.mxu0 0.0
    %1087 = vmatpush.msra.mxu0 %v990
    %1088 = vmatmul.f32.gmra.mxu0 %v1061
    %v1089 = vpop.f32.mrf.mxu0
    %v1090 = vadd.f32 %v1043, %v1089
    %1091 = vmatmul.f32.gmra.mxu0 %v1064
    %v1092 = vpop.f32.mrf.mxu0
    %v1093 = vadd.f32 %v1048, %v1092
    %1094 = vmatmul.f32.gmra.mxu0 %v1067
    %v1095 = vpop.f32.mrf.mxu0
    %v1096 = vadd.f32 %v1053, %v1095
    %1097 = vmatmul.f32.gmra.mxu0 %v1070
    %v1098 = vpop.f32.mrf.mxu0
    %v1099 = vadd.f32 %v1058, %v1098
    %1100 = vdwg.mxu0
    %1101 = vmatpush.msra.mxu0 0.0
    %1102 = vmatpush.msra.mxu0 0.0
    %1103 = vmatpush.msra.mxu0 0.0
    %1104 = vmatpush.msra.mxu0 0.0
    %1105 = vmatpush.msra.mxu0 0.0
    %1106 = vmatpush.msra.mxu0 0.0
    %1107 = vmatpush.msra.mxu0 0.0
    %1108 = vmatpush.msra.mxu0 0.0
    %1109 = vmatpush.msra.mxu0 0.0
    %1110 = vmatpush.msra.mxu0 0.0
    %1111 = vmatpush.msra.mxu0 0.0
    %1112 = vmatpush.msra.mxu0 0.0
    %1113 = vmatpush.msra.mxu0 0.0
    %1114 = vmatpush.msra.mxu0 0.0
    %1115 = vmatpush.msra.mxu0 0.0
    %1116 = vmatpush.msra.mxu0 %v1030
    %1117 = vmatmul.f32.gmra.mxu0 %v1061
    %v1118 = vpop.f32.mrf.mxu0
    %v1119 = vadd.f32 %v1043, %v1118
    %1120 = vmatmul.f32.gmra.mxu0 %v1064
    %v1121 = vpop.f32.mrf.mxu0
    %v1122 = vadd.f32 %v1048, %v1121
    %1123 = vmatmul.f32.gmra.mxu0 %v1067
    %v1124 = vpop.f32.mrf.mxu0
    %v1125 = vadd.f32 %v1053, %v1124
    %1126 = vmatmul.f32.gmra.mxu0 %v1070
    %v1127 = vpop.f32.mrf.mxu0
    %v1128 = vadd.f32 %v1058, %v1127
    %1129 = vdwg.mxu0
    %v1130 = vstv %s41
    %v1131 = vmul.f32 %v1130, %v1090
    %v1132 = vmul.f32 %v1130, %v1119
    %v1133 = vmul.f32 %v1130, %v1093
    %v1134 = vmul.f32 %v1130, %v1122
    %v1135 = vmul.f32 %v1130, %v1096
    %v1136 = vmul.f32 %v1130, %v1125
    %v1137 = vmul.f32 %v1130, %v1099
    %v1138 = vmul.f32 %v1130, %v1128
    %v1139 = vadd.f32 %v42, %v1131
    %v1140 = vadd.f32 %v43, %v1132
    %v1141 = vadd.f32 %v44, %v1133
    %v1142 = vadd.f32 %v45, %v1134
    %v1143 = vadd.f32 %v46, %v1135
    %v1144 = vadd.f32 %v47, %v1136
    %v1145 = vadd.f32 %v48, %v1137
    %v1146 = vadd.f32 %v49, %v1138
    %1147 = vst [vmem:[#allocation6] sm:$0xff] %v1139
    %1148 = vst [vmem:[#allocation6 + $0x8] sm:$0xff] %v1140
    %1149 = vst [vmem:[#allocation6 + $0x10] sm:$0xff] %v1141
    %1150 = vst [vmem:[#allocation6 + $0x18] sm:$0xff] %v1142
    %1151 = vst [vmem:[#allocation6 + $0x20] sm:$0xff] %v1143
    %1152 = vst [vmem:[#allocation6 + $0x28] sm:$0xff] %v1144
    %1153 = vst [vmem:[#allocation6 + $0x30] sm:$0xff] %v1145
    %1154 = vst [vmem:[#allocation6 + $0x38] sm:$0xff] %v1146
    %s1155 = scalar_lea.vmem [#allocation3], 64
    %v1156 = vld [vmem:[%s1155] sm:$0xff]
    %v1157 = vld [vmem:[%s1155 + $0x8] sm:$0xff]
    %v1158 = vld [vmem:[%s1155 + $0x10] sm:$0xff]
    %v1159 = vld [vmem:[%s1155 + $0x18] sm:$0xff]
    %v1160 = vld [vmem:[%s1155 + $0x20] sm:$0xff]
    %v1161 = vld [vmem:[%s1155 + $0x28] sm:$0xff]
    %v1162 = vld [vmem:[%s1155 + $0x30] sm:$0xff]
    %v1163 = vld [vmem:[%s1155 + $0x38] sm:$0xff]
    %v1164 = vld [vmem:[%s1] sm:$0xff]
    %v1165 = vld [vmem:[%s1 + $0x8] sm:$0xff]
    %v1166 = vld [vmem:[%s1 + $0x10] sm:$0xff]
    %v1167 = vld [vmem:[%s2] sm:$0xff]
    %v1168 = vld [vmem:[%s2 + $0x8] sm:$0xff]
    %v1169 = vld [vmem:[%s2 + $0x10] sm:$0xff]
    %1171 = vset.pattern.permute.xlu0 0
    %1172 = vperm.xlu0 %1171, %v1167
    %v1173 = vpop.permute.xlu0 %1172
    %1176 = vset.pattern.permute.xlu0 0
    %1177 = vperm.xlu0 %1176, %v1168
    %v1178 = vpop.permute.xlu0 %1177
    %1181 = vset.pattern.permute.xlu0 0
    %1182 = vperm.xlu0 %1181, %v1169
    %v1183 = vpop.permute.xlu0 %1182
    %v1186 = vsel %vm71, %v1164, 0
    %v1189 = vsel %vm71, %v1165, 0
    %v1192 = vsel %vm71, %v1166, 0
    %1194 = vmatpush.msra.mxu0 0.0
    %1195 = vmatpush.msra.mxu0 0.0
    %1196 = vmatpush.msra.mxu0 0.0
    %1197 = vmatpush.msra.mxu0 0.0
    %1198 = vmatpush.msra.mxu0 0.0
    %1199 = vmatpush.msra.mxu0 0.0
    %1200 = vmatpush.msra.mxu0 0.0
    %1201 = vmatpush.msra.mxu0 0.0
    %1202 = vmatpush.msra.mxu0 0.0
    %1203 = vmatpush.msra.mxu0 0.0
    %1204 = vmatpush.msra.mxu0 0.0
    %1205 = vmatpush.msra.mxu0 0.0
    %1206 = vmatpush.msra.mxu0 %v1162
    %1207 = vmatpush.msra.mxu0 %v1160
    %1208 = vmatpush.msra.mxu0 %v1158
    %1209 = vmatpush.msra.mxu0 %v1156
    %1210 = vmatmul.f32.gmra.mxu0 %v1186
    %v1211 = vpop.f32.mrf.mxu0
    %v1212 = vadd.f32 %v1173, %v1211
    %1213 = vmatmul.f32.gmra.mxu0 %v1189
    %v1214 = vpop.f32.mrf.mxu0
    %v1215 = vadd.f32 %v1178, %v1214
    %1216 = vmatmul.f32.gmra.mxu0 %v1192
    %v1217 = vpop.f32.mrf.mxu0
    %v1218 = vadd.f32 %v1183, %v1217
    %1219 = vdwg.mxu0
    %1220 = vmatpush.msra.mxu0 0.0
    %1221 = vmatpush.msra.mxu0 0.0
    %1222 = vmatpush.msra.mxu0 0.0
    %1223 = vmatpush.msra.mxu0 0.0
    %1224 = vmatpush.msra.mxu0 0.0
    %1225 = vmatpush.msra.mxu0 0.0
    %1226 = vmatpush.msra.mxu0 0.0
    %1227 = vmatpush.msra.mxu0 0.0
    %1228 = vmatpush.msra.mxu0 0.0
    %1229 = vmatpush.msra.mxu0 0.0
    %1230 = vmatpush.msra.mxu0 0.0
    %1231 = vmatpush.msra.mxu0 0.0
    %1232 = vmatpush.msra.mxu0 %v1163
    %1233 = vmatpush.msra.mxu0 %v1161
    %1234 = vmatpush.msra.mxu0 %v1159
    %1235 = vmatpush.msra.mxu0 %v1157
    %1236 = vmatmul.f32.gmra.mxu0 %v1186
    %v1237 = vpop.f32.mrf.mxu0
    %v1238 = vadd.f32 %v1173, %v1237
    %1239 = vmatmul.f32.gmra.mxu0 %v1189
    %v1240 = vpop.f32.mrf.mxu0
    %v1241 = vadd.f32 %v1178, %v1240
    %1242 = vmatmul.f32.gmra.mxu0 %v1192
    %v1243 = vpop.f32.mrf.mxu0
    %v1244 = vadd.f32 %v1183, %v1243
    %1245 = vdwg.mxu0
    %1246 = vxpose.xlu0.b32.start [1/16] %v1215, 128
    %1247 = vxpose.xlu0.b32.cont [2/16] 0.0, 128
    %1248 = vxpose.xlu0.b32.cont [3/16] 0.0, 128
    %1249 = vxpose.xlu0.b32.cont [4/16] 0.0, 128
    %1250 = vxpose.xlu0.b32.cont [5/16] 0.0, 128
    %1251 = vxpose.xlu0.b32.cont [6/16] 0.0, 128
    %1252 = vxpose.xlu0.b32.cont [7/16] 0.0, 128
    %1253 = vxpose.xlu0.b32.cont [8/16] 0.0, 128
    %1254 = vxpose.xlu0.b32.cont [9/16] 0.0, 128
    %1255 = vxpose.xlu0.b32.cont [10/16] 0.0, 128
    %1256 = vxpose.xlu0.b32.cont [11/16] 0.0, 128
    %1257 = vxpose.xlu0.b32.cont [12/16] 0.0, 128
    %1258 = vxpose.xlu0.b32.cont [13/16] 0.0, 128
    %1259 = vxpose.xlu0.b32.cont [14/16] 0.0, 128
    %1260 = vxpose.xlu0.b32.cont [15/16] 0.0, 128
    %1261 = vxpose.xlu0.b32.end [16/16] 0.0, 128
    %v1262 = vpop.trf.xlu0
    %v1263 = vpop.trf.xlu0
    %v1264 = vpop.trf.xlu0
    %v1265 = vpop.trf.xlu0
    %v1266 = vpop.trf.xlu0
    %v1267 = vpop.trf.xlu0
    %v1268 = vpop.trf.xlu0
    %v1269 = vpop.trf.xlu0
    %v1270 = vpop.trf.xlu0
    %v1271 = vpop.trf.xlu0
    %v1272 = vpop.trf.xlu0
    %v1273 = vpop.trf.xlu0
    %v1274 = vpop.trf.xlu0
    %v1275 = vpop.trf.xlu0
    %v1276 = vpop.trf.xlu0
    %v1277 = vpop.trf.xlu0
    %1278 = vxpose.xlu0.b32.start [1/16] %v1241, 128
    %1279 = vxpose.xlu0.b32.cont [2/16] 0.0, 128
    %1280 = vxpose.xlu0.b32.cont [3/16] 0.0, 128
    %1281 = vxpose.xlu0.b32.cont [4/16] 0.0, 128
    %1282 = vxpose.xlu0.b32.cont [5/16] 0.0, 128
    %1283 = vxpose.xlu0.b32.cont [6/16] 0.0, 128
    %1284 = vxpose.xlu0.b32.cont [7/16] 0.0, 128
    %1285 = vxpose.xlu0.b32.cont [8/16] 0.0, 128
    %1286 = vxpose.xlu0.b32.cont [9/16] 0.0, 128
    %1287 = vxpose.xlu0.b32.cont [10/16] 0.0, 128
    %1288 = vxpose.xlu0.b32.cont [11/16] 0.0, 128
    %1289 = vxpose.xlu0.b32.cont [12/16] 0.0, 128
    %1290 = vxpose.xlu0.b32.cont [13/16] 0.0, 128
    %1291 = vxpose.xlu0.b32.cont [14/16] 0.0, 128
    %1292 = vxpose.xlu0.b32.cont [15/16] 0.0, 128
    %1293 = vxpose.xlu0.b32.end [16/16] 0.0, 128
    %v1294 = vpop.trf.xlu0
    %v1295 = vpop.trf.xlu0
    %v1296 = vpop.trf.xlu0
    %v1297 = vpop.trf.xlu0
    %v1298 = vpop.trf.xlu0
    %v1299 = vpop.trf.xlu0
    %v1300 = vpop.trf.xlu0
    %v1301 = vpop.trf.xlu0
    %v1302 = vpop.trf.xlu0
    %v1303 = vpop.trf.xlu0
    %v1304 = vpop.trf.xlu0
    %v1305 = vpop.trf.xlu0
    %v1306 = vpop.trf.xlu0
    %v1307 = vpop.trf.xlu0
    %v1308 = vpop.trf.xlu0
    %v1309 = vpop.trf.xlu0
    %v1311 = vsel %vm197, %v1262, 0
    %v1314 = vsel %vm197, %v1263, 0
    %v1317 = vsel %vm197, %v1264, 0
    %v1320 = vsel %vm197, %v1265, 0
    %v1323 = vsel %vm197, %v1266, 0
    %v1326 = vsel %vm197, %v1267, 0
    %v1329 = vsel %vm197, %v1268, 0
    %v1332 = vsel %vm197, %v1269, 0
    %v1335 = vsel %vm197, %v1270, 0
    %v1338 = vsel %vm197, %v1271, 0
    %v1341 = vsel %vm197, %v1272, 0
    %v1344 = vsel %vm197, %v1273, 0
    %v1347 = vsel %vm197, %v1274, 0
    %v1350 = vsel %vm197, %v1275, 0
    %v1353 = vsel %vm197, %v1276, 0
    %v1356 = vsel %vm197, %v1277, 0
    %v1359 = vsel %vm197, %v1294, 0
    %v1362 = vsel %vm197, %v1295, 0
    %v1365 = vsel %vm197, %v1296, 0
    %v1368 = vsel %vm197, %v1297, 0
    %v1371 = vsel %vm197, %v1298, 0
    %v1374 = vsel %vm197, %v1299, 0
    %v1377 = vsel %vm197, %v1300, 0
    %v1380 = vsel %vm197, %v1301, 0
    %v1383 = vsel %vm197, %v1302, 0
    %v1386 = vsel %vm197, %v1303, 0
    %v1389 = vsel %vm197, %v1304, 0
    %v1392 = vsel %vm197, %v1305, 0
    %v1395 = vsel %vm197, %v1306, 0
    %v1398 = vsel %vm197, %v1307, 0
    %v1401 = vsel %vm197, %v1308, 0
    %v1404 = vsel %vm197, %v1309, 0
    %1406 = vmatpush.msra.mxu0 0.0
    %1407 = vmatpush.msra.mxu0 0.0
    %1408 = vmatpush.msra.mxu0 0.0
    %1409 = vmatpush.msra.mxu0 0.0
    %1410 = vmatpush.msra.mxu0 0.0
    %1411 = vmatpush.msra.mxu0 0.0
    %1412 = vmatpush.msra.mxu0 0.0
    %1413 = vmatpush.msra.mxu0 0.0
    %1414 = vmatpush.msra.mxu0 0.0
    %1415 = vmatpush.msra.mxu0 0.0
    %1416 = vmatpush.msra.mxu0 0.0
    %1417 = vmatpush.msra.mxu0 0.0
    %1418 = vmatpush.msra.mxu0 0.0
    %1419 = vmatpush.msra.mxu0 0.0
    %1420 = vmatpush.msra.mxu0 0.0
    %1421 = vmatpush.msra.mxu0 %v1212
    %1422 = vmatmul.f32.gmra.mxu0 %v1311
    %v1423 = vpop.f32.mrf.mxu0
    %v1424 = vadd.f32 0.0, %v1423
    %1425 = vmatmul.f32.gmra.mxu0 %v1314
    %v1426 = vpop.f32.mrf.mxu0
    %v1427 = vadd.f32 0.0, %v1426
    %1428 = vmatmul.f32.gmra.mxu0 %v1317
    %v1429 = vpop.f32.mrf.mxu0
    %v1430 = vadd.f32 0.0, %v1429
    %1431 = vmatmul.f32.gmra.mxu0 %v1320
    %v1432 = vpop.f32.mrf.mxu0
    %v1433 = vadd.f32 0.0, %v1432
    %1434 = vmatmul.f32.gmra.mxu0 %v1323
    %v1435 = vpop.f32.mrf.mxu0
    %v1436 = vadd.f32 0.0, %v1435
    %1437 = vmatmul.f32.gmra.mxu0 %v1326
    %v1438 = vpop.f32.mrf.mxu0
    %v1439 = vadd.f32 0.0, %v1438
    %1440 = vmatmul.f32.gmra.mxu0 %v1329
    %v1441 = vpop.f32.mrf.mxu0
    %v1442 = vadd.f32 0.0, %v1441
    %1443 = vmatmul.f32.gmra.mxu0 %v1332
    %v1444 = vpop.f32.mrf.mxu0
    %v1445 = vadd.f32 0.0, %v1444
    %1446 = vmatmul.f32.gmra.mxu0 %v1335
    %v1447 = vpop.f32.mrf.mxu0
    %v1448 = vadd.f32 0.0, %v1447
    %1449 = vmatmul.f32.gmra.mxu0 %v1338
    %v1450 = vpop.f32.mrf.mxu0
    %v1451 = vadd.f32 0.0, %v1450
    %1452 = vmatmul.f32.gmra.mxu0 %v1341
    %v1453 = vpop.f32.mrf.mxu0
    %v1454 = vadd.f32 0.0, %v1453
    %1455 = vmatmul.f32.gmra.mxu0 %v1344
    %v1456 = vpop.f32.mrf.mxu0
    %v1457 = vadd.f32 0.0, %v1456
    %1458 = vmatmul.f32.gmra.mxu0 %v1347
    %v1459 = vpop.f32.mrf.mxu0
    %v1460 = vadd.f32 0.0, %v1459
    %1461 = vmatmul.f32.gmra.mxu0 %v1350
    %v1462 = vpop.f32.mrf.mxu0
    %v1463 = vadd.f32 0.0, %v1462
    %1464 = vmatmul.f32.gmra.mxu0 %v1353
    %v1465 = vpop.f32.mrf.mxu0
    %v1466 = vadd.f32 0.0, %v1465
    %1467 = vmatmul.f32.gmra.mxu0 %v1356
    %v1468 = vpop.f32.mrf.mxu0
    %v1469 = vadd.f32 0.0, %v1468
    %1470 = vmatmul.f32.gmra.mxu0 %v1359
    %v1471 = vpop.f32.mrf.mxu0
    %v1472 = vadd.f32 0.0, %v1471
    %1473 = vmatmul.f32.gmra.mxu0 %v1362
    %v1474 = vpop.f32.mrf.mxu0
    %v1475 = vadd.f32 0.0, %v1474
    %1476 = vmatmul.f32.gmra.mxu0 %v1365
    %v1477 = vpop.f32.mrf.mxu0
    %v1478 = vadd.f32 0.0, %v1477
    %1479 = vmatmul.f32.gmra.mxu0 %v1368
    %v1480 = vpop.f32.mrf.mxu0
    %v1481 = vadd.f32 0.0, %v1480
    %1482 = vmatmul.f32.gmra.mxu0 %v1371
    %v1483 = vpop.f32.mrf.mxu0
    %v1484 = vadd.f32 0.0, %v1483
    %1485 = vmatmul.f32.gmra.mxu0 %v1374
    %v1486 = vpop.f32.mrf.mxu0
    %v1487 = vadd.f32 0.0, %v1486
    %1488 = vmatmul.f32.gmra.mxu0 %v1377
    %v1489 = vpop.f32.mrf.mxu0
    %v1490 = vadd.f32 0.0, %v1489
    %1491 = vmatmul.f32.gmra.mxu0 %v1380
    %v1492 = vpop.f32.mrf.mxu0
    %v1493 = vadd.f32 0.0, %v1492
    %1494 = vmatmul.f32.gmra.mxu0 %v1383
    %v1495 = vpop.f32.mrf.mxu0
    %v1496 = vadd.f32 0.0, %v1495
    %1497 = vmatmul.f32.gmra.mxu0 %v1386
    %v1498 = vpop.f32.mrf.mxu0
    %v1499 = vadd.f32 0.0, %v1498
    %1500 = vmatmul.f32.gmra.mxu0 %v1389
    %v1501 = vpop.f32.mrf.mxu0
    %v1502 = vadd.f32 0.0, %v1501
    %1503 = vmatmul.f32.gmra.mxu0 %v1392
    %v1504 = vpop.f32.mrf.mxu0
    %v1505 = vadd.f32 0.0, %v1504
    %1506 = vmatmul.f32.gmra.mxu0 %v1395
    %v1507 = vpop.f32.mrf.mxu0
    %v1508 = vadd.f32 0.0, %v1507
    %1509 = vmatmul.f32.gmra.mxu0 %v1398
    %v1510 = vpop.f32.mrf.mxu0
    %v1511 = vadd.f32 0.0, %v1510
    %1512 = vmatmul.f32.gmra.mxu0 %v1401
    %v1513 = vpop.f32.mrf.mxu0
    %v1514 = vadd.f32 0.0, %v1513
    %1515 = vmatmul.f32.gmra.mxu0 %v1404
    %v1516 = vpop.f32.mrf.mxu0
    %v1517 = vadd.f32 0.0, %v1516
    %1518 = vdwg.mxu0
    %1519 = vmatpush.msra.mxu0 0.0
    %1520 = vmatpush.msra.mxu0 0.0
    %1521 = vmatpush.msra.mxu0 0.0
    %1522 = vmatpush.msra.mxu0 0.0
    %1523 = vmatpush.msra.mxu0 0.0
    %1524 = vmatpush.msra.mxu0 0.0
    %1525 = vmatpush.msra.mxu0 0.0
    %1526 = vmatpush.msra.mxu0 0.0
    %1527 = vmatpush.msra.mxu0 0.0
    %1528 = vmatpush.msra.mxu0 0.0
    %1529 = vmatpush.msra.mxu0 0.0
    %1530 = vmatpush.msra.mxu0 0.0
    %1531 = vmatpush.msra.mxu0 0.0
    %1532 = vmatpush.msra.mxu0 0.0
    %1533 = vmatpush.msra.mxu0 0.0
    %1534 = vmatpush.msra.mxu0 %v1238
    %1535 = vmatmul.f32.gmra.mxu0 %v1311
    %v1536 = vpop.f32.mrf.mxu0
    %v1537 = vadd.f32 0.0, %v1536
    %1538 = vmatmul.f32.gmra.mxu0 %v1314
    %v1539 = vpop.f32.mrf.mxu0
    %v1540 = vadd.f32 0.0, %v1539
    %1541 = vmatmul.f32.gmra.mxu0 %v1317
    %v1542 = vpop.f32.mrf.mxu0
    %v1543 = vadd.f32 0.0, %v1542
    %1544 = vmatmul.f32.gmra.mxu0 %v1320
    %v1545 = vpop.f32.mrf.mxu0
    %v1546 = vadd.f32 0.0, %v1545
    %1547 = vmatmul.f32.gmra.mxu0 %v1323
    %v1548 = vpop.f32.mrf.mxu0
    %v1549 = vadd.f32 0.0, %v1548
    %1550 = vmatmul.f32.gmra.mxu0 %v1326
    %v1551 = vpop.f32.mrf.mxu0
    %v1552 = vadd.f32 0.0, %v1551
    %1553 = vmatmul.f32.gmra.mxu0 %v1329
    %v1554 = vpop.f32.mrf.mxu0
    %v1555 = vadd.f32 0.0, %v1554
    %1556 = vmatmul.f32.gmra.mxu0 %v1332
    %v1557 = vpop.f32.mrf.mxu0
    %v1558 = vadd.f32 0.0, %v1557
    %1559 = vmatmul.f32.gmra.mxu0 %v1335
    %v1560 = vpop.f32.mrf.mxu0
    %v1561 = vadd.f32 0.0, %v1560
    %1562 = vmatmul.f32.gmra.mxu0 %v1338
    %v1563 = vpop.f32.mrf.mxu0
    %v1564 = vadd.f32 0.0, %v1563
    %1565 = vmatmul.f32.gmra.mxu0 %v1341
    %v1566 = vpop.f32.mrf.mxu0
    %v1567 = vadd.f32 0.0, %v1566
    %1568 = vmatmul.f32.gmra.mxu0 %v1344
    %v1569 = vpop.f32.mrf.mxu0
    %v1570 = vadd.f32 0.0, %v1569
    %1571 = vmatmul.f32.gmra.mxu0 %v1347
    %v1572 = vpop.f32.mrf.mxu0
    %v1573 = vadd.f32 0.0, %v1572
    %1574 = vmatmul.f32.gmra.mxu0 %v1350
    %v1575 = vpop.f32.mrf.mxu0
    %v1576 = vadd.f32 0.0, %v1575
    %1577 = vmatmul.f32.gmra.mxu0 %v1353
    %v1578 = vpop.f32.mrf.mxu0
    %v1579 = vadd.f32 0.0, %v1578
    %1580 = vmatmul.f32.gmra.mxu0 %v1356
    %v1581 = vpop.f32.mrf.mxu0
    %v1582 = vadd.f32 0.0, %v1581
    %1583 = vmatmul.f32.gmra.mxu0 %v1359
    %v1584 = vpop.f32.mrf.mxu0
    %v1585 = vadd.f32 0.0, %v1584
    %1586 = vmatmul.f32.gmra.mxu0 %v1362
    %v1587 = vpop.f32.mrf.mxu0
    %v1588 = vadd.f32 0.0, %v1587
    %1589 = vmatmul.f32.gmra.mxu0 %v1365
    %v1590 = vpop.f32.mrf.mxu0
    %v1591 = vadd.f32 0.0, %v1590
    %1592 = vmatmul.f32.gmra.mxu0 %v1368
    %v1593 = vpop.f32.mrf.mxu0
    %v1594 = vadd.f32 0.0, %v1593
    %1595 = vmatmul.f32.gmra.mxu0 %v1371
    %v1596 = vpop.f32.mrf.mxu0
    %v1597 = vadd.f32 0.0, %v1596
    %1598 = vmatmul.f32.gmra.mxu0 %v1374
    %v1599 = vpop.f32.mrf.mxu0
    %v1600 = vadd.f32 0.0, %v1599
    %1601 = vmatmul.f32.gmra.mxu0 %v1377
    %v1602 = vpop.f32.mrf.mxu0
    %v1603 = vadd.f32 0.0, %v1602
    %1604 = vmatmul.f32.gmra.mxu0 %v1380
    %v1605 = vpop.f32.mrf.mxu0
    %v1606 = vadd.f32 0.0, %v1605
    %1607 = vmatmul.f32.gmra.mxu0 %v1383
    %v1608 = vpop.f32.mrf.mxu0
    %v1609 = vadd.f32 0.0, %v1608
    %1610 = vmatmul.f32.gmra.mxu0 %v1386
    %v1611 = vpop.f32.mrf.mxu0
    %v1612 = vadd.f32 0.0, %v1611
    %1613 = vmatmul.f32.gmra.mxu0 %v1389
    %v1614 = vpop.f32.mrf.mxu0
    %v1615 = vadd.f32 0.0, %v1614
    %1616 = vmatmul.f32.gmra.mxu0 %v1392
    %v1617 = vpop.f32.mrf.mxu0
    %v1618 = vadd.f32 0.0, %v1617
    %1619 = vmatmul.f32.gmra.mxu0 %v1395
    %v1620 = vpop.f32.mrf.mxu0
    %v1621 = vadd.f32 0.0, %v1620
    %1622 = vmatmul.f32.gmra.mxu0 %v1398
    %v1623 = vpop.f32.mrf.mxu0
    %v1624 = vadd.f32 0.0, %v1623
    %1625 = vmatmul.f32.gmra.mxu0 %v1401
    %v1626 = vpop.f32.mrf.mxu0
    %v1627 = vadd.f32 0.0, %v1626
    %1628 = vmatmul.f32.gmra.mxu0 %v1404
    %v1629 = vpop.f32.mrf.mxu0
    %v1630 = vadd.f32 0.0, %v1629
    %1631 = vdwg.mxu0
    %v1632 = vmax.f32 %v1424, %v1430
    %v1633 = vmax.f32 %v1427, %v1433
    %v1634 = vmax.f32 %v1632, %v1436
    %v1635 = vmax.f32 %v1633, %v1439
    %v1636 = vmax.f32 %v1634, %v1442
    %v1637 = vmax.f32 %v1635, %v1445
    %v1638 = vmax.f32 %v1636, %v1448
    %v1639 = vmax.f32 %v1637, %v1451
    %v1640 = vmax.f32 %v1638, %v1454
    %v1641 = vmax.f32 %v1639, %v1457
    %v1642 = vmax.f32 %v1640, %v1460
    %v1643 = vmax.f32 %v1641, %v1463
    %v1644 = vmax.f32 %v1642, %v1466
    %v1645 = vmax.f32 %v1643, %v1469
    %v1646 = vmax.f32 %v1644, %v1472
    %v1647 = vmax.f32 %v1645, %v1475
    %v1648 = vmax.f32 %v1646, %v1478
    %v1649 = vmax.f32 %v1647, %v1481
    %v1650 = vmax.f32 %v1648, %v1484
    %v1651 = vmax.f32 %v1649, %v1487
    %v1652 = vmax.f32 %v1650, %v1490
    %v1653 = vmax.f32 %v1651, %v1493
    %v1654 = vmax.f32 %v1652, %v1496
    %v1655 = vmax.f32 %v1653, %v1499
    %v1656 = vmax.f32 %v1654, %v1502
    %v1657 = vmax.f32 %v1655, %v1505
    %v1658 = vmax.f32 %v1656, %v1508
    %v1659 = vmax.f32 %v1657, %v1511
    %v1660 = vmax.f32 %v1658, %v1514
    %v1661 = vmax.f32 %v1659, %v1517
    %v1662 = vmax.f32 %v1660, %v1661
    %v1663 = vrot.slane %v1662, 4
    %v1664 = vmax.f32 %v1662, %v1663
    %v1665 = vrot.slane %v1664, 2
    %v1666 = vmax.f32 %v1664, %v1665
    %v1667 = vrot.slane %v1666, 1
    %v1668 = vmax.f32 %v1666, %v1667
    %v1669 = vmax.f32 %v1537, %v1543
    %v1670 = vmax.f32 %v1540, %v1546
    %v1671 = vmax.f32 %v1669, %v1549
    %v1672 = vmax.f32 %v1670, %v1552
    %v1673 = vmax.f32 %v1671, %v1555
    %v1674 = vmax.f32 %v1672, %v1558
    %v1675 = vmax.f32 %v1673, %v1561
    %v1676 = vmax.f32 %v1674, %v1564
    %v1677 = vmax.f32 %v1675, %v1567
    %v1678 = vmax.f32 %v1676, %v1570
    %v1679 = vmax.f32 %v1677, %v1573
    %v1680 = vmax.f32 %v1678, %v1576
    %v1681 = vmax.f32 %v1679, %v1579
    %v1682 = vmax.f32 %v1680, %v1582
    %v1683 = vmax.f32 %v1681, %v1585
    %v1684 = vmax.f32 %v1682, %v1588
    %v1685 = vmax.f32 %v1683, %v1591
    %v1686 = vmax.f32 %v1684, %v1594
    %v1687 = vmax.f32 %v1685, %v1597
    %v1688 = vmax.f32 %v1686, %v1600
    %v1689 = vmax.f32 %v1687, %v1603
    %v1690 = vmax.f32 %v1688, %v1606
    %v1691 = vmax.f32 %v1689, %v1609
    %v1692 = vmax.f32 %v1690, %v1612
    %v1693 = vmax.f32 %v1691, %v1615
    %v1694 = vmax.f32 %v1692, %v1618
    %v1695 = vmax.f32 %v1693, %v1621
    %v1696 = vmax.f32 %v1694, %v1624
    %v1697 = vmax.f32 %v1695, %v1627
    %v1698 = vmax.f32 %v1696, %v1630
    %v1699 = vmax.f32 %v1697, %v1698
    %v1700 = vrot.slane %v1699, 4
    %v1701 = vmax.f32 %v1699, %v1700
    %v1702 = vrot.slane %v1701, 2
    %v1703 = vmax.f32 %v1701, %v1702
    %v1704 = vrot.slane %v1703, 1
    %v1705 = vmax.f32 %v1703, %v1704
    %v1706 = vsub.f32 %v1424, %v1668
    %v1707 = vsub.f32 %v1537, %v1705
    %v1708 = vsub.f32 %v1427, %v1668
    %v1709 = vsub.f32 %v1540, %v1705
    %v1710 = vsub.f32 %v1430, %v1668
    %v1711 = vsub.f32 %v1543, %v1705
    %v1712 = vsub.f32 %v1433, %v1668
    %v1713 = vsub.f32 %v1546, %v1705
    %v1714 = vsub.f32 %v1436, %v1668
    %v1715 = vsub.f32 %v1549, %v1705
    %v1716 = vsub.f32 %v1439, %v1668
    %v1717 = vsub.f32 %v1552, %v1705
    %v1718 = vsub.f32 %v1442, %v1668
    %v1719 = vsub.f32 %v1555, %v1705
    %v1720 = vsub.f32 %v1445, %v1668
    %v1721 = vsub.f32 %v1558, %v1705
    %v1722 = vsub.f32 %v1448, %v1668
    %v1723 = vsub.f32 %v1561, %v1705
    %v1724 = vsub.f32 %v1451, %v1668
    %v1725 = vsub.f32 %v1564, %v1705
    %v1726 = vsub.f32 %v1454, %v1668
    %v1727 = vsub.f32 %v1567, %v1705
    %v1728 = vsub.f32 %v1457, %v1668
    %v1729 = vsub.f32 %v1570, %v1705
    %v1730 = vsub.f32 %v1460, %v1668
    %v1731 = vsub.f32 %v1573, %v1705
    %v1732 = vsub.f32 %v1463, %v1668
    %v1733 = vsub.f32 %v1576, %v1705
    %v1734 = vsub.f32 %v1466, %v1668
    %v1735 = vsub.f32 %v1579, %v1705
    %v1736 = vsub.f32 %v1469, %v1668
    %v1737 = vsub.f32 %v1582, %v1705
    %v1738 = vsub.f32 %v1472, %v1668
    %v1739 = vsub.f32 %v1585, %v1705
    %v1740 = vsub.f32 %v1475, %v1668
    %v1741 = vsub.f32 %v1588, %v1705
    %v1742 = vsub.f32 %v1478, %v1668
    %v1743 = vsub.f32 %v1591, %v1705
    %v1744 = vsub.f32 %v1481, %v1668
    %v1745 = vsub.f32 %v1594, %v1705
    %v1746 = vsub.f32 %v1484, %v1668
    %v1747 = vsub.f32 %v1597, %v1705
    %v1748 = vsub.f32 %v1487, %v1668
    %v1749 = vsub.f32 %v1600, %v1705
    %v1750 = vsub.f32 %v1490, %v1668
    %v1751 = vsub.f32 %v1603, %v1705
    %v1752 = vsub.f32 %v1493, %v1668
    %v1753 = vsub.f32 %v1606, %v1705
    %v1754 = vsub.f32 %v1496, %v1668
    %v1755 = vsub.f32 %v1609, %v1705
    %v1756 = vsub.f32 %v1499, %v1668
    %v1757 = vsub.f32 %v1612, %v1705
    %v1758 = vsub.f32 %v1502, %v1668
    %v1759 = vsub.f32 %v1615, %v1705
    %v1760 = vsub.f32 %v1505, %v1668
    %v1761 = vsub.f32 %v1618, %v1705
    %v1762 = vsub.f32 %v1508, %v1668
    %v1763 = vsub.f32 %v1621, %v1705
    %v1764 = vsub.f32 %v1511, %v1668
    %v1765 = vsub.f32 %v1624, %v1705
    %v1766 = vsub.f32 %v1514, %v1668
    %v1767 = vsub.f32 %v1627, %v1705
    %v1768 = vsub.f32 %v1517, %v1668
    %v1769 = vsub.f32 %v1630, %v1705
    %v1770 = vmul.f32 %v1706, 1.442695
    %v1771 = vpow.pop %v1770
    %v1772 = vmul.f32 %v1707, 1.442695
    %v1773 = vpow.pop %v1772
    %v1774 = vmul.f32 %v1708, 1.442695
    %v1775 = vpow.pop %v1774
    %v1776 = vmul.f32 %v1709, 1.442695
    %v1777 = vpow.pop %v1776
    %v1778 = vmul.f32 %v1710, 1.442695
    %v1779 = vpow.pop %v1778
    %v1780 = vmul.f32 %v1711, 1.442695
    %v1781 = vpow.pop %v1780
    %v1782 = vmul.f32 %v1712, 1.442695
    %v1783 = vpow.pop %v1782
    %v1784 = vmul.f32 %v1713, 1.442695
    %v1785 = vpow.pop %v1784
    %v1786 = vmul.f32 %v1714, 1.442695
    %v1787 = vpow.pop %v1786
    %v1788 = vmul.f32 %v1715, 1.442695
    %v1789 = vpow.pop %v1788
    %v1790 = vmul.f32 %v1716, 1.442695
    %v1791 = vpow.pop %v1790
    %v1792 = vmul.f32 %v1717, 1.442695
    %v1793 = vpow.pop %v1792
    %v1794 = vmul.f32 %v1718, 1.442695
    %v1795 = vpow.pop %v1794
    %v1796 = vmul.f32 %v1719, 1.442695
    %v1797 = vpow.pop %v1796
    %v1798 = vmul.f32 %v1720, 1.442695
    %v1799 = vpow.pop %v1798
    %v1800 = vmul.f32 %v1721, 1.442695
    %v1801 = vpow.pop %v1800
    %v1802 = vmul.f32 %v1722, 1.442695
    %v1803 = vpow.pop %v1802
    %v1804 = vmul.f32 %v1723, 1.442695
    %v1805 = vpow.pop %v1804
    %v1806 = vmul.f32 %v1724, 1.442695
    %v1807 = vpow.pop %v1806
    %v1808 = vmul.f32 %v1725, 1.442695
    %v1809 = vpow.pop %v1808
    %v1810 = vmul.f32 %v1726, 1.442695
    %v1811 = vpow.pop %v1810
    %v1812 = vmul.f32 %v1727, 1.442695
    %v1813 = vpow.pop %v1812
    %v1814 = vmul.f32 %v1728, 1.442695
    %v1815 = vpow.pop %v1814
    %v1816 = vmul.f32 %v1729, 1.442695
    %v1817 = vpow.pop %v1816
    %v1818 = vmul.f32 %v1730, 1.442695
    %v1819 = vpow.pop %v1818
    %v1820 = vmul.f32 %v1731, 1.442695
    %v1821 = vpow.pop %v1820
    %v1822 = vmul.f32 %v1732, 1.442695
    %v1823 = vpow.pop %v1822
    %v1824 = vmul.f32 %v1733, 1.442695
    %v1825 = vpow.pop %v1824
    %v1826 = vmul.f32 %v1734, 1.442695
    %v1827 = vpow.pop %v1826
    %v1828 = vmul.f32 %v1735, 1.442695
    %v1829 = vpow.pop %v1828
    %v1830 = vmul.f32 %v1736, 1.442695
    %v1831 = vpow.pop %v1830
    %v1832 = vmul.f32 %v1737, 1.442695
    %v1833 = vpow.pop %v1832
    %v1834 = vmul.f32 %v1738, 1.442695
    %v1835 = vpow.pop %v1834
    %v1836 = vmul.f32 %v1739, 1.442695
    %v1837 = vpow.pop %v1836
    %v1838 = vmul.f32 %v1740, 1.442695
    %v1839 = vpow.pop %v1838
    %v1840 = vmul.f32 %v1741, 1.442695
    %v1841 = vpow.pop %v1840
    %v1842 = vmul.f32 %v1742, 1.442695
    %v1843 = vpow.pop %v1842
    %v1844 = vmul.f32 %v1743, 1.442695
    %v1845 = vpow.pop %v1844
    %v1846 = vmul.f32 %v1744, 1.442695
    %v1847 = vpow.pop %v1846
    %v1848 = vmul.f32 %v1745, 1.442695
    %v1849 = vpow.pop %v1848
    %v1850 = vmul.f32 %v1746, 1.442695
    %v1851 = vpow.pop %v1850
    %v1852 = vmul.f32 %v1747, 1.442695
    %v1853 = vpow.pop %v1852
    %v1854 = vmul.f32 %v1748, 1.442695
    %v1855 = vpow.pop %v1854
    %v1856 = vmul.f32 %v1749, 1.442695
    %v1857 = vpow.pop %v1856
    %v1858 = vmul.f32 %v1750, 1.442695
    %v1859 = vpow.pop %v1858
    %v1860 = vmul.f32 %v1751, 1.442695
    %v1861 = vpow.pop %v1860
    %v1862 = vmul.f32 %v1752, 1.442695
    %v1863 = vpow.pop %v1862
    %v1864 = vmul.f32 %v1753, 1.442695
    %v1865 = vpow.pop %v1864
    %v1866 = vmul.f32 %v1754, 1.442695
    %v1867 = vpow.pop %v1866
    %v1868 = vmul.f32 %v1755, 1.442695
    %v1869 = vpow.pop %v1868
    %v1870 = vmul.f32 %v1756, 1.442695
    %v1871 = vpow.pop %v1870
    %v1872 = vmul.f32 %v1757, 1.442695
    %v1873 = vpow.pop %v1872
    %v1874 = vmul.f32 %v1758, 1.442695
    %v1875 = vpow.pop %v1874
    %v1876 = vmul.f32 %v1759, 1.442695
    %v1877 = vpow.pop %v1876
    %v1878 = vmul.f32 %v1760, 1.442695
    %v1879 = vpow.pop %v1878
    %v1880 = vmul.f32 %v1761, 1.442695
    %v1881 = vpow.pop %v1880
    %v1882 = vmul.f32 %v1762, 1.442695
    %v1883 = vpow.pop %v1882
    %v1884 = vmul.f32 %v1763, 1.442695
    %v1885 = vpow.pop %v1884
    %v1886 = vmul.f32 %v1764, 1.442695
    %v1887 = vpow.pop %v1886
    %v1888 = vmul.f32 %v1765, 1.442695
    %v1889 = vpow.pop %v1888
    %v1890 = vmul.f32 %v1766, 1.442695
    %v1891 = vpow.pop %v1890
    %v1892 = vmul.f32 %v1767, 1.442695
    %v1893 = vpow.pop %v1892
    %v1894 = vmul.f32 %v1768, 1.442695
    %v1895 = vpow.pop %v1894
    %v1896 = vmul.f32 %v1769, 1.442695
    %v1897 = vpow.pop %v1896
    %v1898 = vadd.f32 %v1771, %v1775
    %v1899 = vadd.f32 %v1898, %v1779
    %v1900 = vadd.f32 %v1899, %v1783
    %v1901 = vadd.f32 %v1900, %v1787
    %v1902 = vadd.f32 %v1901, %v1791
    %v1903 = vadd.f32 %v1902, %v1795
    %v1904 = vadd.f32 %v1903, %v1799
    %v1905 = vadd.f32 %v1904, %v1803
    %v1906 = vadd.f32 %v1905, %v1807
    %v1907 = vadd.f32 %v1906, %v1811
    %v1908 = vadd.f32 %v1907, %v1815
    %v1909 = vadd.f32 %v1908, %v1819
    %v1910 = vadd.f32 %v1909, %v1823
    %v1911 = vadd.f32 %v1910, %v1827
    %v1912 = vadd.f32 %v1911, %v1831
    %v1913 = vadd.f32 %v1912, %v1835
    %v1914 = vadd.f32 %v1913, %v1839
    %v1915 = vadd.f32 %v1914, %v1843
    %v1916 = vadd.f32 %v1915, %v1847
    %v1917 = vadd.f32 %v1916, %v1851
    %v1918 = vadd.f32 %v1917, %v1855
    %v1919 = vadd.f32 %v1918, %v1859
    %v1920 = vadd.f32 %v1919, %v1863
    %v1921 = vadd.f32 %v1920, %v1867
    %v1922 = vadd.f32 %v1921, %v1871
    %v1923 = vadd.f32 %v1922, %v1875
    %v1924 = vadd.f32 %v1923, %v1879
    %v1925 = vadd.f32 %v1924, %v1883
    %v1926 = vadd.f32 %v1925, %v1887
    %v1927 = vadd.f32 %v1926, %v1891
    %v1928 = vadd.f32 %v1927, %v1895
    %v1929 = vrot.slane %v1928, 4
    %v1930 = vadd.f32 %v1928, %v1929
    %v1931 = vrot.slane %v1930, 2
    %v1932 = vadd.f32 %v1930, %v1931
    %v1933 = vrot.slane %v1932, 1
    %v1934 = vadd.f32 %v1932, %v1933
    %v1935 = vadd.f32 %v1773, %v1777
    %v1936 = vadd.f32 %v1935, %v1781
    %v1937 = vadd.f32 %v1936, %v1785
    %v1938 = vadd.f32 %v1937, %v1789
    %v1939 = vadd.f32 %v1938, %v1793
    %v1940 = vadd.f32 %v1939, %v1797
    %v1941 = vadd.f32 %v1940, %v1801
    %v1942 = vadd.f32 %v1941, %v1805
    %v1943 = vadd.f32 %v1942, %v1809
    %v1944 = vadd.f32 %v1943, %v1813
    %v1945 = vadd.f32 %v1944, %v1817
    %v1946 = vadd.f32 %v1945, %v1821
    %v1947 = vadd.f32 %v1946, %v1825
    %v1948 = vadd.f32 %v1947, %v1829
    %v1949 = vadd.f32 %v1948, %v1833
    %v1950 = vadd.f32 %v1949, %v1837
    %v1951 = vadd.f32 %v1950, %v1841
    %v1952 = vadd.f32 %v1951, %v1845
    %v1953 = vadd.f32 %v1952, %v1849
    %v1954 = vadd.f32 %v1953, %v1853
    %v1955 = vadd.f32 %v1954, %v1857
    %v1956 = vadd.f32 %v1955, %v1861
    %v1957 = vadd.f32 %v1956, %v1865
    %v1958 = vadd.f32 %v1957, %v1869
    %v1959 = vadd.f32 %v1958, %v1873
    %v1960 = vadd.f32 %v1959, %v1877
    %v1961 = vadd.f32 %v1960, %v1881
    %v1962 = vadd.f32 %v1961, %v1885
    %v1963 = vadd.f32 %v1962, %v1889
    %v1964 = vadd.f32 %v1963, %v1893
    %v1965 = vadd.f32 %v1964, %v1897
    %v1966 = vrot.slane %v1965, 4
    %v1967 = vadd.f32 %v1965, %v1966
    %v1968 = vrot.slane %v1967, 2
    %v1969 = vadd.f32 %v1967, %v1968
    %v1970 = vrot.slane %v1969, 1
    %v1971 = vadd.f32 %v1969, %v1970
    %v1972 = vrcp.pop %v1934
    %v1973 = vmul.f32 %v1934, %v1972
    %v1974 = vsub.f32 1.0, %v1973
    %v1975 = vmul.f32 %v1972, %v1974
    %v1976 = vadd.f32 %v1972, %v1975
    %vm1977 = vweird.f32 %v1934
    %vm1978 = vweird.f32 %v1972
    %vm1979 = vmor %vm1977, %vm1978
    %v1980 = vsel %vm1979, %v1972, %v1976
    %v1981 = vand.u32 2147483647, %v1934
    %vm1982 = vcmp.eq.f32.partialorder %v1981, 8.507059e+37
    %v1983 = vand.u32 %v1934, 2147483648
    %v1984 = vor.u32 1.1754944e-38, %v1983
    %v1985 = vsel %vm1982, %v1984, %v1980
    %v1986 = vrcp.pop %v1971
    %v1987 = vmul.f32 %v1971, %v1986
    %v1988 = vsub.f32 1.0, %v1987
    %v1989 = vmul.f32 %v1986, %v1988
    %v1990 = vadd.f32 %v1986, %v1989
    %vm1991 = vweird.f32 %v1971
    %vm1992 = vweird.f32 %v1986
    %vm1993 = vmor %vm1991, %vm1992
    %v1994 = vsel %vm1993, %v1986, %v1990
    %v1995 = vand.u32 2147483647, %v1971
    %vm1996 = vcmp.eq.f32.partialorder %v1995, 8.507059e+37
    %v1997 = vand.u32 %v1971, 2147483648
    %v1998 = vor.u32 1.1754944e-38, %v1997
    %v1999 = vsel %vm1996, %v1998, %v1994
    %v2000 = vmul.f32 %v1771, %v1985
    %v2001 = vmul.f32 %v1773, %v1999
    %v2002 = vmul.f32 %v1775, %v1985
    %v2003 = vmul.f32 %v1777, %v1999
    %v2004 = vmul.f32 %v1779, %v1985
    %v2005 = vmul.f32 %v1781, %v1999
    %v2006 = vmul.f32 %v1783, %v1985
    %v2007 = vmul.f32 %v1785, %v1999
    %v2008 = vmul.f32 %v1787, %v1985
    %v2009 = vmul.f32 %v1789, %v1999
    %v2010 = vmul.f32 %v1791, %v1985
    %v2011 = vmul.f32 %v1793, %v1999
    %v2012 = vmul.f32 %v1795, %v1985
    %v2013 = vmul.f32 %v1797, %v1999
    %v2014 = vmul.f32 %v1799, %v1985
    %v2015 = vmul.f32 %v1801, %v1999
    %v2016 = vmul.f32 %v1803, %v1985
    %v2017 = vmul.f32 %v1805, %v1999
    %v2018 = vmul.f32 %v1807, %v1985
    %v2019 = vmul.f32 %v1809, %v1999
    %v2020 = vmul.f32 %v1811, %v1985
    %v2021 = vmul.f32 %v1813, %v1999
    %v2022 = vmul.f32 %v1815, %v1985
    %v2023 = vmul.f32 %v1817, %v1999
    %v2024 = vmul.f32 %v1819, %v1985
    %v2025 = vmul.f32 %v1821, %v1999
    %v2026 = vmul.f32 %v1823, %v1985
    %v2027 = vmul.f32 %v1825, %v1999
    %v2028 = vmul.f32 %v1827, %v1985
    %v2029 = vmul.f32 %v1829, %v1999
    %v2030 = vmul.f32 %v1831, %v1985
    %v2031 = vmul.f32 %v1833, %v1999
    %v2032 = vmul.f32 %v1835, %v1985
    %v2033 = vmul.f32 %v1837, %v1999
    %v2034 = vmul.f32 %v1839, %v1985
    %v2035 = vmul.f32 %v1841, %v1999
    %v2036 = vmul.f32 %v1843, %v1985
    %v2037 = vmul.f32 %v1845, %v1999
    %v2038 = vmul.f32 %v1847, %v1985
    %v2039 = vmul.f32 %v1849, %v1999
    %v2040 = vmul.f32 %v1851, %v1985
    %v2041 = vmul.f32 %v1853, %v1999
    %v2042 = vmul.f32 %v1855, %v1985
    %v2043 = vmul.f32 %v1857, %v1999
    %v2044 = vmul.f32 %v1859, %v1985
    %v2045 = vmul.f32 %v1861, %v1999
    %v2046 = vmul.f32 %v1863, %v1985
    %v2047 = vmul.f32 %v1865, %v1999
    %v2048 = vmul.f32 %v1867, %v1985
    %v2049 = vmul.f32 %v1869, %v1999
    %v2050 = vmul.f32 %v1871, %v1985
    %v2051 = vmul.f32 %v1873, %v1999
    %v2052 = vmul.f32 %v1875, %v1985
    %v2053 = vmul.f32 %v1877, %v1999
    %v2054 = vmul.f32 %v1879, %v1985
    %v2055 = vmul.f32 %v1881, %v1999
    %v2056 = vmul.f32 %v1883, %v1985
    %v2057 = vmul.f32 %v1885, %v1999
    %v2058 = vmul.f32 %v1887, %v1985
    %v2059 = vmul.f32 %v1889, %v1999
    %v2060 = vmul.f32 %v1891, %v1985
    %v2061 = vmul.f32 %v1893, %v1999
    %v2062 = vmul.f32 %v1895, %v1985
    %v2063 = vmul.f32 %v1897, %v1999
    %2064 = vmatpush.msra.mxu0 %v2030
    %2065 = vmatpush.msra.mxu0 %v2028
    %2066 = vmatpush.msra.mxu0 %v2026
    %2067 = vmatpush.msra.mxu0 %v2024
    %2068 = vmatpush.msra.mxu0 %v2022
    %2069 = vmatpush.msra.mxu0 %v2020
    %2070 = vmatpush.msra.mxu0 %v2018
    %2071 = vmatpush.msra.mxu0 %v2016
    %2072 = vmatpush.msra.mxu0 %v2014
    %2073 = vmatpush.msra.mxu0 %v2012
    %2074 = vmatpush.msra.mxu0 %v2010
    %2075 = vmatpush.msra.mxu0 %v2008
    %2076 = vmatpush.msra.mxu0 %v2006
    %2077 = vmatpush.msra.mxu0 %v2004
    %2078 = vmatpush.msra.mxu0 %v2002
    %2079 = vmatpush.msra.mxu0 %v2000
    %2080 = vmatmul.f32.gmra.mxu0 %v1218
    %v2081 = vpop.f32.mrf.mxu0
    %v2082 = vadd.f32 0.0, %v2081
    %2083 = vdwg.mxu0
    %2084 = vmatpush.msra.mxu0 %v2062
    %2085 = vmatpush.msra.mxu0 %v2060
    %2086 = vmatpush.msra.mxu0 %v2058
    %2087 = vmatpush.msra.mxu0 %v2056
    %2088 = vmatpush.msra.mxu0 %v2054
    %2089 = vmatpush.msra.mxu0 %v2052
    %2090 = vmatpush.msra.mxu0 %v2050
    %2091 = vmatpush.msra.mxu0 %v2048
    %2092 = vmatpush.msra.mxu0 %v2046
    %2093 = vmatpush.msra.mxu0 %v2044
    %2094 = vmatpush.msra.mxu0 %v2042
    %2095 = vmatpush.msra.mxu0 %v2040
    %2096 = vmatpush.msra.mxu0 %v2038
    %2097 = vmatpush.msra.mxu0 %v2036
    %2098 = vmatpush.msra.mxu0 %v2034
    %2099 = vmatpush.msra.mxu0 %v2032
    %2100 = vmatmul.f32.gmra.mxu0 %v1244
    %v2101 = vpop.f32.mrf.mxu0
    %v2102 = vadd.f32 %v2082, %v2101
    %2103 = vdwg.mxu0
    %2104 = vmatpush.msra.mxu0 %v2031
    %2105 = vmatpush.msra.mxu0 %v2029
    %2106 = vmatpush.msra.mxu0 %v2027
    %2107 = vmatpush.msra.mxu0 %v2025
    %2108 = vmatpush.msra.mxu0 %v2023
    %2109 = vmatpush.msra.mxu0 %v2021
    %2110 = vmatpush.msra.mxu0 %v2019
    %2111 = vmatpush.msra.mxu0 %v2017
    %2112 = vmatpush.msra.mxu0 %v2015
    %2113 = vmatpush.msra.mxu0 %v2013
    %2114 = vmatpush.msra.mxu0 %v2011
    %2115 = vmatpush.msra.mxu0 %v2009
    %2116 = vmatpush.msra.mxu0 %v2007
    %2117 = vmatpush.msra.mxu0 %v2005
    %2118 = vmatpush.msra.mxu0 %v2003
    %2119 = vmatpush.msra.mxu0 %v2001
    %2120 = vmatmul.f32.gmra.mxu0 %v1218
    %v2121 = vpop.f32.mrf.mxu0
    %v2122 = vadd.f32 0.0, %v2121
    %2123 = vdwg.mxu0
    %2124 = vmatpush.msra.mxu0 %v2063
    %2125 = vmatpush.msra.mxu0 %v2061
    %2126 = vmatpush.msra.mxu0 %v2059
    %2127 = vmatpush.msra.mxu0 %v2057
    %2128 = vmatpush.msra.mxu0 %v2055
    %2129 = vmatpush.msra.mxu0 %v2053
    %2130 = vmatpush.msra.mxu0 %v2051
    %2131 = vmatpush.msra.mxu0 %v2049
    %2132 = vmatpush.msra.mxu0 %v2047
    %2133 = vmatpush.msra.mxu0 %v2045
    %2134 = vmatpush.msra.mxu0 %v2043
    %2135 = vmatpush.msra.mxu0 %v2041
    %2136 = vmatpush.msra.mxu0 %v2039
    %2137 = vmatpush.msra.mxu0 %v2037
    %2138 = vmatpush.msra.mxu0 %v2035
    %2139 = vmatpush.msra.mxu0 %v2033
    %2140 = vmatmul.f32.gmra.mxu0 %v1244
    %v2141 = vpop.f32.mrf.mxu0
    %v2142 = vadd.f32 %v2122, %v2141
    %2143 = vdwg.mxu0
    %v2144 = vld [vmem:[%s3] sm:$0xff]
    %v2145 = vld [vmem:[%s3 + $0x8] sm:$0xff]
    %v2146 = vld [vmem:[%s3 + $0x10] sm:$0xff]
    %v2147 = vld [vmem:[%s3 + $0x18] sm:$0xff]
    %v2148 = vld [vmem:[%s4] sm:$0xff]
    %v2149 = vld [vmem:[%s4 + $0x8] sm:$0xff]
    %v2150 = vld [vmem:[%s4 + $0x10] sm:$0xff]
    %v2151 = vld [vmem:[%s4 + $0x18] sm:$0xff]
    %2153 = vset.pattern.permute.xlu0 0
    %2154 = vperm.xlu0 %2153, %v2148
    %v2155 = vpop.permute.xlu0 %2154
    %2158 = vset.pattern.permute.xlu0 0
    %2159 = vperm.xlu0 %2158, %v2149
    %v2160 = vpop.permute.xlu0 %2159
    %2163 = vset.pattern.permute.xlu0 0
    %2164 = vperm.xlu0 %2163, %v2150
    %v2165 = vpop.permute.xlu0 %2164
    %2168 = vset.pattern.permute.xlu0 0
    %2169 = vperm.xlu0 %2168, %v2151
    %v2170 = vpop.permute.xlu0 %2169
    %v2173 = vsel %vm197, %v2144, 0
    %v2176 = vsel %vm197, %v2145, 0
    %v2179 = vsel %vm197, %v2146, 0
    %v2182 = vsel %vm197, %v2147, 0
    %2184 = vmatpush.msra.mxu0 0.0
    %2185 = vmatpush.msra.mxu0 0.0
    %2186 = vmatpush.msra.mxu0 0.0
    %2187 = vmatpush.msra.mxu0 0.0
    %2188 = vmatpush.msra.mxu0 0.0
    %2189 = vmatpush.msra.mxu0 0.0
    %2190 = vmatpush.msra.mxu0 0.0
    %2191 = vmatpush.msra.mxu0 0.0
    %2192 = vmatpush.msra.mxu0 0.0
    %2193 = vmatpush.msra.mxu0 0.0
    %2194 = vmatpush.msra.mxu0 0.0
    %2195 = vmatpush.msra.mxu0 0.0
    %2196 = vmatpush.msra.mxu0 0.0
    %2197 = vmatpush.msra.mxu0 0.0
    %2198 = vmatpush.msra.mxu0 0.0
    %2199 = vmatpush.msra.mxu0 %v2102
    %2200 = vmatmul.f32.gmra.mxu0 %v2173
    %v2201 = vpop.f32.mrf.mxu0
    %v2202 = vadd.f32 %v2155, %v2201
    %2203 = vmatmul.f32.gmra.mxu0 %v2176
    %v2204 = vpop.f32.mrf.mxu0
    %v2205 = vadd.f32 %v2160, %v2204
    %2206 = vmatmul.f32.gmra.mxu0 %v2179
    %v2207 = vpop.f32.mrf.mxu0
    %v2208 = vadd.f32 %v2165, %v2207
    %2209 = vmatmul.f32.gmra.mxu0 %v2182
    %v2210 = vpop.f32.mrf.mxu0
    %v2211 = vadd.f32 %v2170, %v2210
    %2212 = vdwg.mxu0
    %2213 = vmatpush.msra.mxu0 0.0
    %2214 = vmatpush.msra.mxu0 0.0
    %2215 = vmatpush.msra.mxu0 0.0
    %2216 = vmatpush.msra.mxu0 0.0
    %2217 = vmatpush.msra.mxu0 0.0
    %2218 = vmatpush.msra.mxu0 0.0
    %2219 = vmatpush.msra.mxu0 0.0
    %2220 = vmatpush.msra.mxu0 0.0
    %2221 = vmatpush.msra.mxu0 0.0
    %2222 = vmatpush.msra.mxu0 0.0
    %2223 = vmatpush.msra.mxu0 0.0
    %2224 = vmatpush.msra.mxu0 0.0
    %2225 = vmatpush.msra.mxu0 0.0
    %2226 = vmatpush.msra.mxu0 0.0
    %2227 = vmatpush.msra.mxu0 0.0
    %2228 = vmatpush.msra.mxu0 %v2142
    %2229 = vmatmul.f32.gmra.mxu0 %v2173
    %v2230 = vpop.f32.mrf.mxu0
    %v2231 = vadd.f32 %v2155, %v2230
    %2232 = vmatmul.f32.gmra.mxu0 %v2176
    %v2233 = vpop.f32.mrf.mxu0
    %v2234 = vadd.f32 %v2160, %v2233
    %2235 = vmatmul.f32.gmra.mxu0 %v2179
    %v2236 = vpop.f32.mrf.mxu0
    %v2237 = vadd.f32 %v2165, %v2236
    %2238 = vmatmul.f32.gmra.mxu0 %v2182
    %v2239 = vpop.f32.mrf.mxu0
    %v2240 = vadd.f32 %v2170, %v2239
    %2241 = vdwg.mxu0
    %v2242 = vmul.f32 %v1130, %v2202
    %v2243 = vmul.f32 %v1130, %v2231
    %v2244 = vmul.f32 %v1130, %v2205
    %v2245 = vmul.f32 %v1130, %v2234
    %v2246 = vmul.f32 %v1130, %v2208
    %v2247 = vmul.f32 %v1130, %v2237
    %v2248 = vmul.f32 %v1130, %v2211
    %v2249 = vmul.f32 %v1130, %v2240
    %v2250 = vadd.f32 %v1156, %v2242
    %v2251 = vadd.f32 %v1157, %v2243
    %v2252 = vadd.f32 %v1158, %v2244
    %v2253 = vadd.f32 %v1159, %v2245
    %v2254 = vadd.f32 %v1160, %v2246
    %v2255 = vadd.f32 %v1161, %v2247
    %v2256 = vadd.f32 %v1162, %v2248
    %v2257 = vadd.f32 %v1163, %v2249
    %s2258 = scalar_lea.vmem [#allocation6], 64
    %2259 = vst [vmem:[%s2258] sm:$0xff] %v2250
    %2260 = vst [vmem:[%s2258 + $0x8] sm:$0xff] %v2251
    %2261 = vst [vmem:[%s2258 + $0x10] sm:$0xff] %v2252
    %2262 = vst [vmem:[%s2258 + $0x18] sm:$0xff] %v2253
    %2263 = vst [vmem:[%s2258 + $0x20] sm:$0xff] %v2254
    %2264 = vst [vmem:[%s2258 + $0x28] sm:$0xff] %v2255
    %2265 = vst [vmem:[%s2258 + $0x30] sm:$0xff] %v2256
    %2266 = vst [vmem:[%s2258 + $0x38] sm:$0xff] %v2257
    // Predicated region
    $region30: #{tpu_custom_call.1} parent=1 // pred_check
      _
    $region31: #{tpu_custom_call.1} parent=1 // pred_check_branch
      %2268 = sbr.rel (0) target = $region33
    $region32: #{tpu_custom_call.1} parent=1 // pred_region
      %2270 = vsyncadd [#allocation5], 0
      %s2271 = sshll.u32 [#allocation6], 4
      %s2272 = int_to_ptr.vmem [resolvable:$true] %s2271
      %s2273 = sshll.u32 %s6, 4
      %s2274 = int_to_ptr.hbm [resolvable:$true] %s2273
      %2279 = dma.vmem_to_hbm [thread:$0]  %s2272, 2048, %s2274, [#allocation5], 256, 256, 16
    $region33: #{tpu_custom_call.1} parent=1 // pred_fallthru
      _
    // Predicated region
    $region34: #{tpu_custom_call.1} parent=1 // pred_check
      _
    $region35: #{tpu_custom_call.1} parent=1 // pred_check_branch
      %2281 = sbr.rel (0) target = $region37
    $region36: #{tpu_custom_call.1} parent=1 // pred_region
      %2283 = dma.done [#allocation5], 2048
    $region37: #{tpu_custom_call.1} parent=1 // pred_fallthru
      _
    %2284 = vsyncpa [#allocation4], 1
    %2285 = vsyncpa [#allocation5], 1

</llo_original>
